<compile_context>
chip_gen: v7x
topology: tpu7x:2x2x1
jax: 0.10.0
libtpu: 0.0.40
codegen_flags: <defaults>
</compile_context>

<pallas_src>
import math
from functools import partial

import jax
import jax.numpy as jnp
from jax import lax
from jax.experimental import pallas as pl
from jax.experimental.pallas import tpu as pltpu


def _round_up(x, m):
    return ((x + m - 1) // m) * m


def _spatial_self_attn_kernel(x_ref, gmat_ref, gamma_ref, beta_ref,
                              wqkv_ref, bqkv_ref, wp_ref, bp_ref,
                              out_ref, q_s, k_s, v_s,
                              *, n_heads, head_channels, num_groups, eps,
                              real_c, real_l, q_tile):
    Lp, D = q_s.shape
    Hc = head_channels
    n_qt = Lp // q_tile
    n_pad = Lp - real_l

    # ------------------- GroupNorm statistics (two-pass, biased variance) -------------------
    gmat = gmat_ref[...]                               # (Cp, G) one-hot channel->group (pad rows = 0)
    n_per_group = jnp.float32((real_c // num_groups) * real_l)
    dn_scatter = (((1,), (1,)), ((), ()))              # (1,G) x (Cp,G)^T -> (1,Cp)

    x_full = x_ref[0]                                  # transient (Lp, Cp) f32 — dies after stats
    sum_x = jnp.sum(x_full, axis=0, keepdims=True)
    mean_g = jnp.dot(sum_x, gmat, preferred_element_type=jnp.float32) / n_per_group
    mean_c = lax.dot_general(mean_g, gmat, dn_scatter, preferred_element_type=jnp.float32)
    xc = x_full - mean_c
    if n_pad:                                          # zero padded rows before the variance pass
        row_ids = lax.broadcasted_iota(jnp.int32, (Lp, 1), 0)
        xc = jnp.where(row_ids < real_l, xc, 0.0)
    sum_d2 = jnp.sum(xc * xc, axis=0, keepdims=True)
    var_g = jnp.dot(sum_d2, gmat, preferred_element_type=jnp.float32) / n_per_group
    rstd_c = lax.dot_general(lax.rsqrt(var_g + eps), gmat, dn_scatter,
                             preferred_element_type=jnp.float32)
    # fold GN affine into per-channel scale/shift:  x_n = x * scale_c + shift_c
    scale_c = rstd_c * gamma_ref[...]                  # (1, Cp)
    shift_c = beta_ref[...] - mean_c * scale_c         # (1, Cp)

    def run_tiles(body):
        if n_qt == 1:
            body(0, 0)
        else:
            lax.fori_loop(0, n_qt, body, 0, unroll=True if n_qt <= 8 else 2)

    def tile_start(t):
        t0 = t * q_tile
        return t0 if isinstance(t0, int) else pl.multiple_of(t0, q_tile)

    # -------- Phase B: tiled GroupNorm-apply + fused QKV projection -> bf16 VMEM scratch --------
    # attention scale 1/sqrt(sqrt(Hc)) is pre-folded into wq/wk (and bq/bk) in the wrapper.
    def qkv_tile(t, carry):
        t0 = tile_start(t)
        xt = x_ref[0, pl.ds(t0, q_tile), :]                                      # (tq, Cp) f32
        xn = (xt * scale_c + shift_c).astype(jnp.bfloat16)
        qkv = jnp.dot(xn, wqkv_ref[...],
                      preferred_element_type=jnp.float32) + bqkv_ref[...]        # (tq, 3D) f32
        q_s[pl.ds(t0, q_tile), :] = qkv[:, :D].astype(jnp.bfloat16)              # lane-dense stores
        k_s[pl.ds(t0, q_tile), :] = qkv[:, D:2 * D].astype(jnp.bfloat16)
        v_s[pl.ds(t0, q_tile), :] = qkv[:, 2 * D:].astype(jnp.bfloat16)
        return carry

    run_tiles(qkv_tile)

    # ------- Phase C: attention (q-tile outer, head inner) + tiled projection + residual -------
    dn_qkT = (((1,), (1,)), ((), ()))                  # contract head-feature dims: q . k^T
    if n_pad:
        key_ids = lax.broadcasted_iota(jnp.int32, (q_tile, Lp), 1)
        logit_bias = jnp.where(key_ids < real_l, 0.0, -1e30).astype(jnp.float32)  # hoisted once
    else:
        logit_bias = None

    def attn_tile(t, carry):
        t0 = tile_start(t)
        head_outs = []
        for h in range(n_heads):                       # small static head loop
            lo = h * Hc
            qh = q_s[pl.ds(t0, q_tile), lo:lo + Hc]                              # (tq, Hc) bf16
            kh = k_s[:, lo:lo + Hc]                                              # (Lp, Hc) bf16
            vh = v_s[:, lo:lo + Hc]                                              # (Lp, Hc) bf16
            s = lax.dot_general(qh, kh, dn_qkT,
                                preferred_element_type=jnp.float32)              # (tq, Lp) f32
            if logit_bias is not None:
                s = s + logit_bias                     # mask padded key positions
            m = jnp.max(s, axis=-1, keepdims=True)
            p = jnp.exp(s - m)                         # f32 softmax statistics (safe on v5e too)
            inv_l = pl.reciprocal(jnp.sum(p, axis=-1, keepdims=True), approx=True)
            ah = jnp.dot(p.astype(jnp.bfloat16), vh,
                         preferred_element_type=jnp.float32)                     # (tq, Hc) f32
            head_outs.append(ah * inv_l)               # deferred softmax normalization
        a_t = (head_outs[0] if n_heads == 1
               else jnp.concatenate(head_outs, axis=-1)).astype(jnp.bfloat16)    # (tq, D), one cast
        out_t = jnp.dot(a_t, wp_ref[...], preferred_element_type=jnp.float32)    # (tq, Cp) f32
        out_ref[0, pl.ds(t0, q_tile), :] = (
            out_t + bp_ref[...] + x_ref[0, pl.ds(t0, q_tile), :]).astype(out_ref.dtype)
        return carry

    run_tiles(attn_tile)


def spatial_self_attention_block(x_nchw, params, *, n_heads, head_channels,
                                 num_groups=32, eps=1e-5, q_tile=None):
    """Forward of SpatialSelfAttentionBlock (the conditioning arg is unreachable in the module)."""
    B, C, H, W = x_nchw.shape
    L = H * W
    D = n_heads * head_channels
    G = num_groups
    assert C % G == 0, "GroupNorm(32, C) requires C % 32 == 0"

    Cp = _round_up(C, 128)                 # lane-dense channel axis

    # query tile: single tile for small L, else 256 (raise to 512 on v5e/v6e for very large L).
    if q_tile is None:
        q_tile = _round_up(L, 8) if L <= 256 else 256
    q_tile = max(8, _round_up(q_tile, 8))
    Lp = _round_up(L, q_tile)              # pad tokens instead of falling back to a full-L tile

    # ---- layout: NCHW -> (B, Lp, Cp) token-major, zero-padded tokens/channels ----
    x_blc = jnp.transpose(x_nchw, (0, 2, 3, 1)).reshape(B, L, C).astype(jnp.float32)
    if (Lp, Cp) != (L, C):
        x_blc = jnp.pad(x_blc, ((0, 0), (0, Lp - L), (0, Cp - C)))

    ch = jnp.arange(Cp)
    gmat = (((ch[:, None] // (C // G)) == jnp.arange(G)[None, :])
            & (ch[:, None] < C)).astype(jnp.float32)                  # (Cp, G), pad rows = 0

    def pad_c_vec(v):
        return jnp.zeros((1, Cp), jnp.float32).at[0, :C].set(v.reshape(C).astype(jnp.float32))

    gamma = pad_c_vec(params["norm_w"])
    beta = pad_c_vec(params["norm_b"])

    # Conv1d(k=1) weights (out, in, 1) -> (in, out); attention scale folded into Wq/Wk (+ biases).
    scale = 1.0 / math.sqrt(math.sqrt(head_channels))
    wq = params["wq"].reshape(D, C).T.astype(jnp.float32) * scale
    wk = params["wk"].reshape(D, C).T.astype(jnp.float32) * scale
    wv = params["wv"].reshape(D, C).T.astype(jnp.float32)
    wqkv = jnp.concatenate([wq, wk, wv], axis=1)                      # (C, 3D)
    if Cp != C:
        wqkv = jnp.pad(wqkv, ((0, Cp - C), (0, 0)))
    wqkv = wqkv.astype(jnp.bfloat16)
    bqkv = jnp.concatenate([params["bq"].reshape(1, D) * scale,
                            params["bk"].reshape(1, D) * scale,
                            params["bv"].reshape(1, D)], axis=1).astype(jnp.float32)

    wp = params["wp"].reshape(C, D).T.astype(jnp.float32)             # (D, C)
    if Cp != C:
        wp = jnp.pad(wp, ((0, 0), (0, Cp - C)))
    wp = wp.astype(jnp.bfloat16)
    bp = pad_c_vec(params["bp"])

    def full_spec(shape):
        nd = len(shape)
        return pl.BlockSpec(shape, lambda b, _nd=nd: (0,) * _nd)

    kernel = partial(_spatial_self_attn_kernel, n_heads=n_heads,
                     head_channels=head_channels, num_groups=G, eps=eps,
                     real_c=C, real_l=L, q_tile=q_tile)

    # VMEM budget estimate: in/out blocks (double-buffered), GN transients, bf16 QKV scratch,
    # weights (double-buffered), per-tile logits / matmul temporaries.
    est = (4 * Lp * Cp * 4 + 2 * Lp * Cp * 4
           + 3 * Lp * D * 2
           + 4 * (Cp * 3 * D + D * Cp) * 2
           + 3 * q_tile * Lp * 4
           + 2 * q_tile * max(3 * D, Cp) * 4)
    vmem_limit = int(min(max(est * 1.25, 24 * 1024 * 1024), 100 * 1024 * 1024))

    out_blc = pl.pallas_call(
        kernel,
        out_shape=jax.ShapeDtypeStruct((B, Lp, Cp), jnp.float32),
        grid_spec=pltpu.PrefetchScalarGridSpec(
            num_scalar_prefetch=0,
            grid=(B,),
            in_specs=[
                pl.BlockSpec((1, Lp, Cp), lambda b: (b, 0, 0)),   # x (pre-norm, residual)
                full_spec((Cp, G)),                               # channel->group one-hot
                full_spec((1, Cp)), full_spec((1, Cp)),           # gamma, beta
                full_spec((Cp, 3 * D)), full_spec((1, 3 * D)),    # fused QKV weight / bias
                full_spec((D, Cp)), full_spec((1, Cp)),           # proj weight / bias
            ],
            out_specs=pl.BlockSpec((1, Lp, Cp), lambda b: (b, 0, 0)),
            scratch_shapes=[
                pltpu.VMEM((Lp, D), jnp.bfloat16),                # Q scratch
                pltpu.VMEM((Lp, D), jnp.bfloat16),                # K scratch
                pltpu.VMEM((Lp, D), jnp.bfloat16),                # V scratch
            ],
        ),
        compiler_params=pltpu.CompilerParams(
            dimension_semantics=("parallel",),
            vmem_limit_bytes=vmem_limit),
    )(x_blc, gmat, gamma, beta, wqkv, bqkv, wp, bp)

    out = out_blc[:, :L, :C].reshape(B, H, W, C)
    return jnp.transpose(out, (0, 3, 1, 2))


def reference(x, params, *, n_heads, head_channels, num_groups=32, eps=1e-5):
    """Pure-JAX mirror of the PyTorch forward (for correctness check)."""
    B, C, H, W = x.shape
    L = H * W
    D = n_heads * head_channels
    xg = x.reshape(B, num_groups, C // num_groups, H, W)
    mean = xg.mean(axis=(2, 3, 4), keepdims=True)
    var = xg.var(axis=(2, 3, 4), keepdims=True)            # biased, like torch
    xn = ((xg - mean) / jnp.sqrt(var + eps)).reshape(B, C, H, W)
    xn = xn * params["norm_w"][None, :, None, None] + params["norm_b"][None, :, None, None]
    xs = xn.reshape(B, C, L)
    hp = jax.lax.Precision.HIGHEST
    wq = params["wq"].reshape(D, C); wk = params["wk"].reshape(D, C)
    wv = params["wv"].reshape(D, C); wp = params["wp"].reshape(C, D)
    q = jnp.einsum('oc,bcl->bol', wq, xs, precision=hp) + params["bq"][None, :, None]
    k = jnp.einsum('oc,bcl->bol', wk, xs, precision=hp) + params["bk"][None, :, None]
    v = jnp.einsum('oc,bcl->bol', wv, xs, precision=hp) + params["bv"][None, :, None]
    q = q.reshape(B * n_heads, head_channels, L)
    k = k.reshape(B * n_heads, head_channels, L)
    v = v.reshape(B * n_heads, head_channels, L)
    scale = 1.0 / math.sqrt(math.sqrt(head_channels))
    w = jnp.einsum('bct,bcs->bts', q * scale, k * scale, precision=hp)
    w = jax.nn.softmax(w, axis=-1)
    a = jnp.einsum('bts,bcs->bct', w, v, precision=hp).reshape(B, D, L)
    out = jnp.einsum('od,bdl->bol', wp, a, precision=hp) + params["bp"][None, :, None]
    return out.reshape(B, C, H, W) + x


if __name__ == "__main__":
    # small shapes consistent with the module: GroupNorm(32, C) requires C % 32 == 0
    B, C, H, W = 2, 32, 8, 8
    n_heads, head_channels = 4, 32
    D = n_heads * head_channels

    key = jax.random.PRNGKey(0)
    ks = jax.random.split(key, 10)
    params = {
        "norm_w": 1.0 + 0.1 * jax.random.normal(ks[0], (C,), jnp.float32),
        "norm_b": 0.1 * jax.random.normal(ks[1], (C,), jnp.float32),
        "wq": 0.05 * jax.random.normal(ks[2], (D, C, 1), jnp.float32),
        "bq": 0.05 * jax.random.normal(ks[3], (D,), jnp.float32),
        "wk": 0.05 * jax.random.normal(ks[4], (D, C, 1), jnp.float32),
        "bk": 0.05 * jax.random.normal(ks[5], (D,), jnp.float32),
        "wv": 0.05 * jax.random.normal(ks[6], (D, C, 1), jnp.float32),
        "bv": 0.05 * jax.random.normal(ks[7], (D,), jnp.float32),
        "wp": 0.05 * jax.random.normal(ks[8], (C, D, 1), jnp.float32),
        "bp": 0.05 * jax.random.normal(ks[9], (C,), jnp.float32),
    }
    x = jax.random.normal(jax.random.PRNGKey(42), (B, C, H, W), jnp.float32)

    out = spatial_self_attention_block(x, params, n_heads=n_heads,
                                       head_channels=head_channels)
    out = jax.block_until_ready(out)

    ref = jax.block_until_ready(reference(x, params, n_heads=n_heads,
                                          head_channels=head_channels))
    assert out.shape == (B, C, H, W)
    # bf16 MXU operands (f32 accumulation) -> slightly looser tolerance than pure f32
    assert jnp.allclose(out, ref, atol=2e-2, rtol=2e-2), \
        f"max abs err {jnp.max(jnp.abs(out - ref))}"
    print("KERNEL_OK")
</pallas_src>

<mosaic_0001>
module attributes {stable_mosaic.version = 11 : i64} {
  func.func @_spatial_self_attn_kernel(%arg0: i32, %arg1: memref<1x64x128xf32, #tpu.memory_space<vmem>>, %arg2: memref<128x32xf32, #tpu.memory_space<vmem>>, %arg3: memref<1x128xf32, #tpu.memory_space<vmem>>, %arg4: memref<1x128xf32, #tpu.memory_space<vmem>>, %arg5: memref<128x384xbf16, #tpu.memory_space<vmem>>, %arg6: memref<1x384xf32, #tpu.memory_space<vmem>>, %arg7: memref<128x128xbf16, #tpu.memory_space<vmem>>, %arg8: memref<1x128xf32, #tpu.memory_space<vmem>>, %arg9: memref<1x64x128xf32, #tpu.memory_space<vmem>>, %arg10: memref<64x128xbf16, #tpu.memory_space<vmem>>, %arg11: memref<64x128xbf16, #tpu.memory_space<vmem>>, %arg12: memref<64x128xbf16, #tpu.memory_space<vmem>>) attributes {dimension_semantics = [#tpu.dimension_semantics<parallel>], iteration_bounds = array<i64: 2>, scalar_prefetch = 0 : i64, scratch_operands = 3 : i64, tpu.core_type = #tpu.core_type<tc>, window_params = [{transform_indices = @transform_0, window_bounds = array<i64: 1, 64, 128>}, {pipeline_mode = #tpu.pipeline_mode<synchronous>, transform_indices = @transform_1, window_bounds = array<i64: 128, 32>}, {pipeline_mode = #tpu.pipeline_mode<synchronous>, transform_indices = @transform_2, window_bounds = array<i64: 1, 128>}, {pipeline_mode = #tpu.pipeline_mode<synchronous>, transform_indices = @transform_3, window_bounds = array<i64: 1, 128>}, {pipeline_mode = #tpu.pipeline_mode<synchronous>, transform_indices = @transform_4, window_bounds = array<i64: 128, 384>}, {pipeline_mode = #tpu.pipeline_mode<synchronous>, transform_indices = @transform_5, window_bounds = array<i64: 1, 384>}, {pipeline_mode = #tpu.pipeline_mode<synchronous>, transform_indices = @transform_6, window_bounds = array<i64: 128, 128>}, {pipeline_mode = #tpu.pipeline_mode<synchronous>, transform_indices = @transform_7, window_bounds = array<i64: 1, 128>}, {transform_indices = @transform_8, window_bounds = array<i64: 1, 64, 128>}]} {
    %c0 = arith.constant 0 : index
    %c0_0 = arith.constant 0 : index
    %0 = vector.load %arg2[%c0, %c0_0] : memref<128x32xf32, #tpu.memory_space<vmem>>, vector<128x32xf32>
    %c0_1 = arith.constant 0 : index
    %c0_2 = arith.constant 0 : index
    %c0_3 = arith.constant 0 : index
    %1 = vector.load %arg1[%c0_1, %c0_2, %c0_3] : memref<1x64x128xf32, #tpu.memory_space<vmem>>, vector<1x64x128xf32>
    %2 = vector.shape_cast %1 : vector<1x64x128xf32> to vector<64x128xf32>
    %cst = arith.constant dense<0.000000e+00> : vector<128xf32>
    %3 = vector.multi_reduction <add>, %2, %cst [0] : vector<64x128xf32> to vector<128xf32>
    %4 = vector.shape_cast %3 : vector<128xf32> to vector<1x128xf32>
    %cst_4 = arith.constant dense<0.000000e+00> : vector<1x32xf32>
    %5 = tpu.matmul %4, %0, %cst_4 {dimension_numbers = #tpu.dot_dimension_numbers<[1], [0], [0], [1], [0, 0, 1, 1], [], []>} : vector<1x128xf32>, vector<128x32xf32>, vector<1x32xf32> -> vector<1x32xf32>
    %cst_5 = arith.constant 6.400000e+01 : f32
    %6 = vector.broadcast %cst_5 : f32 to vector<1x32xf32>
    %7 = arith.divf %5, %6 : vector<1x32xf32>
    %cst_6 = arith.constant dense<0.000000e+00> : vector<1x128xf32>
    %8 = tpu.matmul %7, %0, %cst_6 {dimension_numbers = #tpu.dot_dimension_numbers<[1], [1], [0], [0], [0, 0, 1, 0], [], []>} : vector<1x32xf32>, vector<128x32xf32>, vector<1x128xf32> -> vector<1x128xf32>
    %9 = vector.broadcast %8 : vector<1x128xf32> to vector<64x128xf32>
    %10 = arith.subf %2, %9 : vector<64x128xf32>
    %11 = arith.mulf %10, %10 : vector<64x128xf32>
    %cst_7 = arith.constant dense<0.000000e+00> : vector<128xf32>
    %12 = vector.multi_reduction <add>, %11, %cst_7 [0] : vector<64x128xf32> to vector<128xf32>
    %13 = vector.shape_cast %12 : vector<128xf32> to vector<1x128xf32>
    %cst_8 = arith.constant dense<0.000000e+00> : vector<1x32xf32>
    %14 = tpu.matmul %13, %0, %cst_8 {dimension_numbers = #tpu.dot_dimension_numbers<[1], [0], [0], [1], [0, 0, 1, 1], [], []>} : vector<1x128xf32>, vector<128x32xf32>, vector<1x32xf32> -> vector<1x32xf32>
    %cst_9 = arith.constant 6.400000e+01 : f32
    %15 = vector.broadcast %cst_9 : f32 to vector<1x32xf32>
    %16 = arith.divf %14, %15 : vector<1x32xf32>
    %cst_10 = arith.constant 9.99999974E-6 : f32
    %17 = vector.broadcast %cst_10 : f32 to vector<1x32xf32>
    %18 = arith.addf %16, %17 : vector<1x32xf32>
    %19 = math.rsqrt %18 : vector<1x32xf32>
    %cst_11 = arith.constant dense<0.000000e+00> : vector<1x128xf32>
    %20 = tpu.matmul %19, %0, %cst_11 {dimension_numbers = #tpu.dot_dimension_numbers<[1], [1], [0], [0], [0, 0, 1, 0], [], []>} : vector<1x32xf32>, vector<128x32xf32>, vector<1x128xf32> -> vector<1x128xf32>
    %c0_12 = arith.constant 0 : index
    %c0_13 = arith.constant 0 : index
    %21 = vector.load %arg3[%c0_12, %c0_13] : memref<1x128xf32, #tpu.memory_space<vmem>>, vector<1x128xf32>
    %22 = arith.mulf %20, %21 : vector<1x128xf32>
    %c0_14 = arith.constant 0 : index
    %c0_15 = arith.constant 0 : index
    %23 = vector.load %arg4[%c0_14, %c0_15] : memref<1x128xf32, #tpu.memory_space<vmem>>, vector<1x128xf32>
    %24 = arith.mulf %8, %22 : vector<1x128xf32>
    %25 = arith.subf %23, %24 : vector<1x128xf32>
    %c0_16 = arith.constant 0 : index
    %c0_17 = arith.constant 0 : index
    %c0_18 = arith.constant 0 : index
    %26 = vector.load %arg1[%c0_16, %c0_17, %c0_18] : memref<1x64x128xf32, #tpu.memory_space<vmem>>, vector<1x64x128xf32>
    %27 = vector.shape_cast %26 : vector<1x64x128xf32> to vector<64x128xf32>
    %28 = vector.broadcast %22 : vector<1x128xf32> to vector<64x128xf32>
    %29 = arith.mulf %27, %28 : vector<64x128xf32>
    %30 = vector.broadcast %25 : vector<1x128xf32> to vector<64x128xf32>
    %31 = arith.addf %29, %30 : vector<64x128xf32>
    %32 = arith.truncf %31 : vector<64x128xf32> to vector<64x128xbf16>
    %c0_19 = arith.constant 0 : index
    %c0_20 = arith.constant 0 : index
    %33 = vector.load %arg5[%c0_19, %c0_20] : memref<128x384xbf16, #tpu.memory_space<vmem>>, vector<128x384xbf16>
    %cst_21 = arith.constant dense<0.000000e+00> : vector<64x384xf32>
    %34 = tpu.matmul %32, %33, %cst_21 {dimension_numbers = #tpu.dot_dimension_numbers<[1], [0], [0], [1], [0, 0, 1, 1], [], []>} : vector<64x128xbf16>, vector<128x384xbf16>, vector<64x384xf32> -> vector<64x384xf32>
    %c0_22 = arith.constant 0 : index
    %c0_23 = arith.constant 0 : index
    %35 = vector.load %arg6[%c0_22, %c0_23] : memref<1x384xf32, #tpu.memory_space<vmem>>, vector<1x384xf32>
    %36 = vector.broadcast %35 : vector<1x384xf32> to vector<64x384xf32>
    %37 = arith.addf %34, %36 : vector<64x384xf32>
    %38 = vector.extract_strided_slice %37 {offsets = [0, 0], sizes = [64, 128], strides = [1, 1]} : vector<64x384xf32> to vector<64x128xf32>
    %39 = arith.truncf %38 : vector<64x128xf32> to vector<64x128xbf16>
    %c0_24 = arith.constant 0 : index
    %c0_25 = arith.constant 0 : index
    %40 = vector.load %arg10[%c0_24, %c0_25] : memref<64x128xbf16, #tpu.memory_space<vmem>>, vector<64x128xbf16>
    tpu.vector_store %arg10[%c0_24, %c0_25], %39 {strides = array<i32>} : memref<64x128xbf16, #tpu.memory_space<vmem>>, vector<64x128xbf16>,
    %41 = vector.extract_strided_slice %37 {offsets = [0, 128], sizes = [64, 128], strides = [1, 1]} : vector<64x384xf32> to vector<64x128xf32>
    %42 = arith.truncf %41 : vector<64x128xf32> to vector<64x128xbf16>
    %c0_26 = arith.constant 0 : index
    %c0_27 = arith.constant 0 : index
    %43 = vector.load %arg11[%c0_26, %c0_27] : memref<64x128xbf16, #tpu.memory_space<vmem>>, vector<64x128xbf16>
    tpu.vector_store %arg11[%c0_26, %c0_27], %42 {strides = array<i32>} : memref<64x128xbf16, #tpu.memory_space<vmem>>, vector<64x128xbf16>,
    %44 = vector.extract_strided_slice %37 {offsets = [0, 256], sizes = [64, 128], strides = [1, 1]} : vector<64x384xf32> to vector<64x128xf32>
    %45 = arith.truncf %44 : vector<64x128xf32> to vector<64x128xbf16>
    %c0_28 = arith.constant 0 : index
    %c0_29 = arith.constant 0 : index
    %46 = vector.load %arg12[%c0_28, %c0_29] : memref<64x128xbf16, #tpu.memory_space<vmem>>, vector<64x128xbf16>
    tpu.vector_store %arg12[%c0_28, %c0_29], %45 {strides = array<i32>} : memref<64x128xbf16, #tpu.memory_space<vmem>>, vector<64x128xbf16>,
    %c0_30 = arith.constant 0 : index
    %c0_31 = arith.constant 0 : index
    %47 = vector.load %arg10[%c0_30, %c0_31] : memref<64x128xbf16, #tpu.memory_space<vmem>>, vector<64x32xbf16>
    %c0_32 = arith.constant 0 : index
    %c0_33 = arith.constant 0 : index
    %48 = vector.load %arg11[%c0_32, %c0_33] : memref<64x128xbf16, #tpu.memory_space<vmem>>, vector<64x32xbf16>
    %c0_34 = arith.constant 0 : index
    %c0_35 = arith.constant 0 : index
    %49 = vector.load %arg12[%c0_34, %c0_35] : memref<64x128xbf16, #tpu.memory_space<vmem>>, vector<64x32xbf16>
    %cst_36 = arith.constant dense<0.000000e+00> : vector<64x64xf32>
    %50 = tpu.matmul %47, %48, %cst_36 {dimension_numbers = #tpu.dot_dimension_numbers<[1], [1], [0], [0], [0, 0, 1, 0], [], []>} : vector<64x32xbf16>, vector<64x32xbf16>, vector<64x64xf32> -> vector<64x64xf32>
    %cst_37 = arith.constant dense<0xFF800000> : vector<64xf32>
    %51 = vector.multi_reduction <maximumf>, %50, %cst_37 [1] : vector<64x64xf32> to vector<64xf32>
    %52 = vector.shape_cast %51 : vector<64xf32> to vector<64x1xf32>
    %53 = vector.broadcast %52 : vector<64x1xf32> to vector<64x64xf32>
    %54 = arith.subf %50, %53 : vector<64x64xf32>
    %55 = math.exp %54 : vector<64x64xf32>
    %cst_38 = arith.constant dense<0.000000e+00> : vector<64xf32>
    %56 = vector.multi_reduction <add>, %55, %cst_38 [1] : vector<64x64xf32> to vector<64xf32>
    %57 = vector.shape_cast %56 : vector<64xf32> to vector<64x1xf32>
    %58 = tpu.reciprocal %57 {approx = true} : vector<64x1xf32> -> vector<64x1xf32>
    %59 = arith.truncf %55 : vector<64x64xf32> to vector<64x64xbf16>
    %cst_39 = arith.constant dense<0.000000e+00> : vector<64x32xf32>
    %60 = tpu.matmul %59, %49, %cst_39 {dimension_numbers = #tpu.dot_dimension_numbers<[1], [0], [0], [1], [0, 0, 1, 1], [], []>} : vector<64x64xbf16>, vector<64x32xbf16>, vector<64x32xf32> -> vector<64x32xf32>
    %61 = vector.broadcast %58 : vector<64x1xf32> to vector<64x32xf32>
    %62 = arith.mulf %60, %61 : vector<64x32xf32>
    %c0_40 = arith.constant 0 : index
    %c32 = arith.constant 32 : index
    %63 = vector.load %arg10[%c0_40, %c32] : memref<64x128xbf16, #tpu.memory_space<vmem>>, vector<64x32xbf16>
    %c0_41 = arith.constant 0 : index
    %c32_42 = arith.constant 32 : index
    %64 = vector.load %arg11[%c0_41, %c32_42] : memref<64x128xbf16, #tpu.memory_space<vmem>>, vector<64x32xbf16>
    %c0_43 = arith.constant 0 : index
    %c32_44 = arith.constant 32 : index
    %65 = vector.load %arg12[%c0_43, %c32_44] : memref<64x128xbf16, #tpu.memory_space<vmem>>, vector<64x32xbf16>
    %cst_45 = arith.constant dense<0.000000e+00> : vector<64x64xf32>
    %66 = tpu.matmul %63, %64, %cst_45 {dimension_numbers = #tpu.dot_dimension_numbers<[1], [1], [0], [0], [0, 0, 1, 0], [], []>} : vector<64x32xbf16>, vector<64x32xbf16>, vector<64x64xf32> -> vector<64x64xf32>
    %cst_46 = arith.constant dense<0xFF800000> : vector<64xf32>
    %67 = vector.multi_reduction <maximumf>, %66, %cst_46 [1] : vector<64x64xf32> to vector<64xf32>
    %68 = vector.shape_cast %67 : vector<64xf32> to vector<64x1xf32>
    %69 = vector.broadcast %68 : vector<64x1xf32> to vector<64x64xf32>
    %70 = arith.subf %66, %69 : vector<64x64xf32>
    %71 = math.exp %70 : vector<64x64xf32>
    %cst_47 = arith.constant dense<0.000000e+00> : vector<64xf32>
    %72 = vector.multi_reduction <add>, %71, %cst_47 [1] : vector<64x64xf32> to vector<64xf32>
    %73 = vector.shape_cast %72 : vector<64xf32> to vector<64x1xf32>
    %74 = tpu.reciprocal %73 {approx = true} : vector<64x1xf32> -> vector<64x1xf32>
    %75 = arith.truncf %71 : vector<64x64xf32> to vector<64x64xbf16>
    %cst_48 = arith.constant dense<0.000000e+00> : vector<64x32xf32>
    %76 = tpu.matmul %75, %65, %cst_48 {dimension_numbers = #tpu.dot_dimension_numbers<[1], [0], [0], [1], [0, 0, 1, 1], [], []>} : vector<64x64xbf16>, vector<64x32xbf16>, vector<64x32xf32> -> vector<64x32xf32>
    %77 = vector.broadcast %74 : vector<64x1xf32> to vector<64x32xf32>
    %78 = arith.mulf %76, %77 : vector<64x32xf32>
    %c0_49 = arith.constant 0 : index
    %c64 = arith.constant 64 : index
    %79 = vector.load %arg10[%c0_49, %c64] : memref<64x128xbf16, #tpu.memory_space<vmem>>, vector<64x32xbf16>
    %c0_50 = arith.constant 0 : index
    %c64_51 = arith.constant 64 : index
    %80 = vector.load %arg11[%c0_50, %c64_51] : memref<64x128xbf16, #tpu.memory_space<vmem>>, vector<64x32xbf16>
    %c0_52 = arith.constant 0 : index
    %c64_53 = arith.constant 64 : index
    %81 = vector.load %arg12[%c0_52, %c64_53] : memref<64x128xbf16, #tpu.memory_space<vmem>>, vector<64x32xbf16>
    %cst_54 = arith.constant dense<0.000000e+00> : vector<64x64xf32>
    %82 = tpu.matmul %79, %80, %cst_54 {dimension_numbers = #tpu.dot_dimension_numbers<[1], [1], [0], [0], [0, 0, 1, 0], [], []>} : vector<64x32xbf16>, vector<64x32xbf16>, vector<64x64xf32> -> vector<64x64xf32>
    %cst_55 = arith.constant dense<0xFF800000> : vector<64xf32>
    %83 = vector.multi_reduction <maximumf>, %82, %cst_55 [1] : vector<64x64xf32> to vector<64xf32>
    %84 = vector.shape_cast %83 : vector<64xf32> to vector<64x1xf32>
    %85 = vector.broadcast %84 : vector<64x1xf32> to vector<64x64xf32>
    %86 = arith.subf %82, %85 : vector<64x64xf32>
    %87 = math.exp %86 : vector<64x64xf32>
    %cst_56 = arith.constant dense<0.000000e+00> : vector<64xf32>
    %88 = vector.multi_reduction <add>, %87, %cst_56 [1] : vector<64x64xf32> to vector<64xf32>
    %89 = vector.shape_cast %88 : vector<64xf32> to vector<64x1xf32>
    %90 = tpu.reciprocal %89 {approx = true} : vector<64x1xf32> -> vector<64x1xf32>
    %91 = arith.truncf %87 : vector<64x64xf32> to vector<64x64xbf16>
    %cst_57 = arith.constant dense<0.000000e+00> : vector<64x32xf32>
    %92 = tpu.matmul %91, %81, %cst_57 {dimension_numbers = #tpu.dot_dimension_numbers<[1], [0], [0], [1], [0, 0, 1, 1], [], []>} : vector<64x64xbf16>, vector<64x32xbf16>, vector<64x32xf32> -> vector<64x32xf32>
    %93 = vector.broadcast %90 : vector<64x1xf32> to vector<64x32xf32>
    %94 = arith.mulf %92, %93 : vector<64x32xf32>
    %c0_58 = arith.constant 0 : index
    %c96 = arith.constant 96 : index
    %95 = vector.load %arg10[%c0_58, %c96] : memref<64x128xbf16, #tpu.memory_space<vmem>>, vector<64x32xbf16>
    %c0_59 = arith.constant 0 : index
    %c96_60 = arith.constant 96 : index
    %96 = vector.load %arg11[%c0_59, %c96_60] : memref<64x128xbf16, #tpu.memory_space<vmem>>, vector<64x32xbf16>
    %c0_61 = arith.constant 0 : index
    %c96_62 = arith.constant 96 : index
    %97 = vector.load %arg12[%c0_61, %c96_62] : memref<64x128xbf16, #tpu.memory_space<vmem>>, vector<64x32xbf16>
    %cst_63 = arith.constant dense<0.000000e+00> : vector<64x64xf32>
    %98 = tpu.matmul %95, %96, %cst_63 {dimension_numbers = #tpu.dot_dimension_numbers<[1], [1], [0], [0], [0, 0, 1, 0], [], []>} : vector<64x32xbf16>, vector<64x32xbf16>, vector<64x64xf32> -> vector<64x64xf32>
    %cst_64 = arith.constant dense<0xFF800000> : vector<64xf32>
    %99 = vector.multi_reduction <maximumf>, %98, %cst_64 [1] : vector<64x64xf32> to vector<64xf32>
    %100 = vector.shape_cast %99 : vector<64xf32> to vector<64x1xf32>
    %101 = vector.broadcast %100 : vector<64x1xf32> to vector<64x64xf32>
    %102 = arith.subf %98, %101 : vector<64x64xf32>
    %103 = math.exp %102 : vector<64x64xf32>
    %cst_65 = arith.constant dense<0.000000e+00> : vector<64xf32>
    %104 = vector.multi_reduction <add>, %103, %cst_65 [1] : vector<64x64xf32> to vector<64xf32>
    %105 = vector.shape_cast %104 : vector<64xf32> to vector<64x1xf32>
    %106 = tpu.reciprocal %105 {approx = true} : vector<64x1xf32> -> vector<64x1xf32>
    %107 = arith.truncf %103 : vector<64x64xf32> to vector<64x64xbf16>
    %cst_66 = arith.constant dense<0.000000e+00> : vector<64x32xf32>
    %108 = tpu.matmul %107, %97, %cst_66 {dimension_numbers = #tpu.dot_dimension_numbers<[1], [0], [0], [1], [0, 0, 1, 1], [], []>} : vector<64x64xbf16>, vector<64x32xbf16>, vector<64x32xf32> -> vector<64x32xf32>
    %109 = vector.broadcast %106 : vector<64x1xf32> to vector<64x32xf32>
    %110 = arith.mulf %108, %109 : vector<64x32xf32>
    %111 = tpu.concatenate %62, %78, %94, %110 in 1 : vector<64x32xf32>, vector<64x32xf32>, vector<64x32xf32>, vector<64x32xf32> -> vector<64x128xf32>
    %112 = arith.truncf %111 : vector<64x128xf32> to vector<64x128xbf16>
    %c0_67 = arith.constant 0 : index
    %c0_68 = arith.constant 0 : index
    %113 = vector.load %arg7[%c0_67, %c0_68] : memref<128x128xbf16, #tpu.memory_space<vmem>>, vector<128x128xbf16>
    %cst_69 = arith.constant dense<0.000000e+00> : vector<64x128xf32>
    %114 = tpu.matmul %112, %113, %cst_69 {dimension_numbers = #tpu.dot_dimension_numbers<[1], [0], [0], [1], [0, 0, 1, 1], [], []>} : vector<64x128xbf16>, vector<128x128xbf16>, vector<64x128xf32> -> vector<64x128xf32>
    %c0_70 = arith.constant 0 : index
    %c0_71 = arith.constant 0 : index
    %115 = vector.load %arg8[%c0_70, %c0_71] : memref<1x128xf32, #tpu.memory_space<vmem>>, vector<1x128xf32>
    %116 = vector.broadcast %115 : vector<1x128xf32> to vector<64x128xf32>
    %117 = arith.addf %114, %116 : vector<64x128xf32>
    %c0_72 = arith.constant 0 : index
    %c0_73 = arith.constant 0 : index
    %c0_74 = arith.constant 0 : index
    %118 = vector.load %arg1[%c0_72, %c0_73, %c0_74] : memref<1x64x128xf32, #tpu.memory_space<vmem>>, vector<1x64x128xf32>
    %119 = vector.shape_cast %118 : vector<1x64x128xf32> to vector<64x128xf32>
    %120 = arith.addf %117, %119 : vector<64x128xf32>
    %c0_75 = arith.constant 0 : index
    %c0_76 = arith.constant 0 : index
    %c0_77 = arith.constant 0 : index
    %121 = vector.load %arg9[%c0_75, %c0_76, %c0_77] : memref<1x64x128xf32, #tpu.memory_space<vmem>>, vector<1x64x128xf32>
    %122 = vector.shape_cast %121 : vector<1x64x128xf32> to vector<64x128xf32>
    %123 = vector.shape_cast %120 : vector<64x128xf32> to vector<1x64x128xf32>
    tpu.vector_store %arg9[%c0_75, %c0_76, %c0_77], %123 {strides = array<i32>} : memref<1x64x128xf32, #tpu.memory_space<vmem>>, vector<1x64x128xf32>,
    return
  }
  func.func @transform_0(%arg0: i32) -> (i32, i32, i32) {
    %c0_i32 = arith.constant 0 : i32
    %c0_i32_0 = arith.constant 0 : i32
    %c0_i32_1 = arith.constant 0 : i32
    return %arg0, %c0_i32, %c0_i32_0 : i32, i32, i32
  }
  func.func @transform_1(%arg0: i32) -> (i32, i32) {
    %c0_i32 = arith.constant 0 : i32
    %c0_i32_0 = arith.constant 0 : i32
    %c0_i32_1 = arith.constant 0 : i32
    return %c0_i32, %c0_i32_0 : i32, i32
  }
  func.func @transform_2(%arg0: i32) -> (i32, i32) {
    %c0_i32 = arith.constant 0 : i32
    %c0_i32_0 = arith.constant 0 : i32
    %c0_i32_1 = arith.constant 0 : i32
    return %c0_i32, %c0_i32_0 : i32, i32
  }
  func.func @transform_3(%arg0: i32) -> (i32, i32) {
    %c0_i32 = arith.constant 0 : i32
    %c0_i32_0 = arith.constant 0 : i32
    %c0_i32_1 = arith.constant 0 : i32
    return %c0_i32, %c0_i32_0 : i32, i32
  }
  func.func @transform_4(%arg0: i32) -> (i32, i32) {
    %c0_i32 = arith.constant 0 : i32
    %c0_i32_0 = arith.constant 0 : i32
    %c0_i32_1 = arith.constant 0 : i32
    return %c0_i32, %c0_i32_0 : i32, i32
  }
  func.func @transform_5(%arg0: i32) -> (i32, i32) {
    %c0_i32 = arith.constant 0 : i32
    %c0_i32_0 = arith.constant 0 : i32
    %c0_i32_1 = arith.constant 0 : i32
    return %c0_i32, %c0_i32_0 : i32, i32
  }
  func.func @transform_6(%arg0: i32) -> (i32, i32) {
    %c0_i32 = arith.constant 0 : i32
    %c0_i32_0 = arith.constant 0 : i32
    %c0_i32_1 = arith.constant 0 : i32
    return %c0_i32, %c0_i32_0 : i32, i32
  }
  func.func @transform_7(%arg0: i32) -> (i32, i32) {
    %c0_i32 = arith.constant 0 : i32
    %c0_i32_0 = arith.constant 0 : i32
    %c0_i32_1 = arith.constant 0 : i32
    return %c0_i32, %c0_i32_0 : i32, i32
  }
  func.func @transform_8(%arg0: i32) -> (i32, i32, i32) {
    %c0_i32 = arith.constant 0 : i32
    %c0_i32_0 = arith.constant 0 : i32
    %c0_i32_1 = arith.constant 0 : i32
    return %arg0, %c0_i32, %c0_i32_0 : i32, i32, i32
  }
}

</mosaic_0001>

<llo_original>
// kernel: tpu_custom_call.1
$region0: #{tpu_custom_call.1}
  #allocation0 [shape = 'u32[]', space=smem, size = 0x4, offset = 0x4, fixed_abs, tag = 'smem constant byte address 0x4 - core index']
  #allocation1 [shape = 'u32[144,128]{1,0:T(1,128)}', space=vmem, size = 0x12000, scoped, tag = 'internal scratch']
  #allocation2 [shape = 'bf16[64,128]{1,0:T(16,128)(2,1)}', space=vmem, size = 0x4000, scoped, tag = 'scratch operand']
  #allocation3 [shape = 'bf16[64,128]{1,0:T(16,128)(2,1)}', space=vmem, size = 0x4000, scoped, tag = 'scratch operand']
  #allocation4 [shape = 'bf16[64,128]{1,0:T(16,128)(2,1)}', space=vmem, size = 0x4000, scoped, tag = 'scratch operand']
  %s0 = inlined_call_operand.vmem [shape: f32[2,64,128], index: 0, kind: input, shape index: {}]
  %s1 = inlined_call_operand.vmem [shape: f32[128,32], index: 1, kind: input, shape index: {}]
  %s2 = inlined_call_operand.vmem [shape: f32[1,128], index: 2, kind: input, shape index: {}]
  %s3 = inlined_call_operand.vmem [shape: f32[1,128], index: 3, kind: input, shape index: {}]
  %s4 = inlined_call_operand.hbm [shape: bf16[128,384], index: 4, kind: input, shape index: {}]
  %s5 = inlined_call_operand.vmem [shape: f32[1,384], index: 5, kind: input, shape index: {}]
  %s6 = inlined_call_operand.hbm [shape: bf16[128,128], index: 6, kind: input, shape index: {}]
  %s7 = inlined_call_operand.vmem [shape: f32[1,128], index: 7, kind: input, shape index: {}]
  %s8 = inlined_call_operand.hbm [shape: f32[2,64,128], index: 8, kind: output, shape index: {}]
  %s9 = sld [smem:[#allocation0]]
  $region73: #{tpu_custom_call.1} parent=0
    _
  %s11 = ssub.s32 1, %s9
  %s12 = scalar_select 0, %s11, %s9
  $region1: #{tpu_custom_call.1} parent=0
    #allocation5 [shape = 'u8[98304]{0}', space=vmem, size = 0x18000, scoped, tag = 'input window, operand 4, single buffered']
    #allocation6 [shape = 's32[2]{0}', space=sflag, size = 0x8, scoped, tag = 'scoped memory for tpu_custom_call.1']
    #allocation7 [shape = 's32[2]{0}', space=sflag, size = 0x8, scoped, tag = 'scoped memory for tpu_custom_call.1']
    #allocation8 [shape = 'u8[32768]{0}', space=vmem, size = 0x8000, scoped, tag = 'input window, operand 6, single buffered']
    #allocation9 [shape = 's32[1]{0}', space=sflag, size = 0x4, scoped, tag = 'scoped memory for tpu_custom_call.1']
    #allocation10 [shape = 'u8[65536]{0}', space=vmem, size = 0x10000, scoped, tag = 'output window, operand 0']
    %13 = vsyncpa [#allocation6], 0
    %14 = vsyncpa [#allocation9], 0
    %15 = vsyncpa [#allocation7], 0
    %s16 = scalar_lea.sflag [#allocation7], 1
    %17 = vsyncpa %s16, 0
    loop: start=0, step=1, limit=4
    $region2: #{tpu_custom_call.1} parent=1 // loop_pre_header
      _
    $region3: #{tpu_custom_call.1} parent=1 // loop_header
      %s19 = sphi 0, %s23
      %p20 = scmp.ge.s32.totalorder %s19, 4
      %s29 = sphi 0, %s31
      %s32 = sphi 0, %s29
      %s33 = sphi 0, %s32
      %s49 = sphi 0, %s33
      %s53 = sphi 0, %s53
      %s55 = sphi 0, %s53
      %s56 = sphi 0, %s55
      %s70 = sphi 0, %s56
      %s74 = sphi 0, %s74
      %s76 = sphi 0, %s74
      %s77 = sphi 0, %s76
      %s91 = sphi 0, %s77
      %s95 = sphi 0, %s95
      %s97 = sphi 0, %s95
      %s98 = sphi 0, %s97
      %s112 = sphi 0, %s98
      %s116 = sphi 0, %s116
      %s118 = sphi 0, %s116
      %s119 = sphi 0, %s118
      %s133 = sphi 0, %s119
      %s137 = sphi 0, %s137
      %s139 = sphi 0, %s137
      %s140 = sphi 0, %s139
      %s154 = sphi 0, %s140
      %s158 = sphi 0, %s158
      %s160 = sphi 0, %s158
      %s161 = sphi 0, %s160
      %s175 = sphi 0, %s161
      %s179 = sphi 0, %s179
      %s181 = sphi 0, %s179
      %s182 = sphi 0, %s181
      %s196 = sphi 0, %s182
      %s202 = sphi 0, %s204
      %s205 = sphi 0, %s202
      %s206 = sphi 0, %s205
      %s222 = sphi 0, %s206
    $region4: #{tpu_custom_call.1} parent=1 // loop_header_branch
      %22 = sbr.rel (%p20) target = $region8
    $region5: #{tpu_custom_call.1} parent=1 // loop_body
      %s24 = ssub.s32 %s19, 1
      %s25 = ssub.s32 %s19, 2
      %s26 = sadd.s32 %s19, 1
      %s27 = ssub.s32 %s19, %s26
      %p28 = scmp.eq.s32.totalorder %s27, 0
      %s30 = sadd.s32 %s29, 1
      %s31 = scalar_select %p28, %s29, %s30
      %p34 = pneg %p28
      %p35 = scmp.eq.s32.totalorder %s19, 1
      %p36 = por %p34, %p35
      %p37 = scmp.ne.s32.totalorder %s29, %s32
      %p38 = scmp.eq.s32.totalorder %s19, 0
      %p39 = por %p37, %p38
      %p40 = scmp.ne.s32.totalorder %s29, %s32
      %p41 = scmp.eq.s32.totalorder %s24, 1
      %p42 = por %p40, %p41
      %p43 = scmp.ne.s32.totalorder %s32, %s33
      %p44 = scmp.eq.s32.totalorder %s24, 0
      %p45 = por %p43, %p44
      %p46 = scmp.ne.s32.totalorder %s32, %s33
      %p47 = scmp.eq.s32.totalorder %s25, 1
      %p48 = por %p46, %p47
      %p50 = scmp.ne.s32.totalorder %s33, %s49
      %p51 = scmp.eq.s32.totalorder %s25, 0
      %p52 = por %p50, %p51
      %s54 = sadd.s32 %s53, 1
      %p57 = scmp.eq.s32.totalorder %s19, 1
      %p58 = scmp.ne.s32.totalorder %s53, %s55
      %p59 = scmp.eq.s32.totalorder %s19, 0
      %p60 = por %p58, %p59
      %p61 = scmp.ne.s32.totalorder %s53, %s55
      %p62 = scmp.eq.s32.totalorder %s24, 1
      %p63 = por %p61, %p62
      %p64 = scmp.ne.s32.totalorder %s55, %s56
      %p65 = scmp.eq.s32.totalorder %s24, 0
      %p66 = por %p64, %p65
      %p67 = scmp.ne.s32.totalorder %s55, %s56
      %p68 = scmp.eq.s32.totalorder %s25, 1
      %p69 = por %p67, %p68
      %p71 = scmp.ne.s32.totalorder %s56, %s70
      %p72 = scmp.eq.s32.totalorder %s25, 0
      %p73 = por %p71, %p72
      %s75 = sadd.s32 %s74, 1
      %p78 = scmp.eq.s32.totalorder %s19, 1
      %p79 = scmp.ne.s32.totalorder %s74, %s76
      %p80 = scmp.eq.s32.totalorder %s19, 0
      %p81 = por %p79, %p80
      %p82 = scmp.ne.s32.totalorder %s74, %s76
      %p83 = scmp.eq.s32.totalorder %s24, 1
      %p84 = por %p82, %p83
      %p85 = scmp.ne.s32.totalorder %s76, %s77
      %p86 = scmp.eq.s32.totalorder %s24, 0
      %p87 = por %p85, %p86
      %p88 = scmp.ne.s32.totalorder %s76, %s77
      %p89 = scmp.eq.s32.totalorder %s25, 1
      %p90 = por %p88, %p89
      %p92 = scmp.ne.s32.totalorder %s77, %s91
      %p93 = scmp.eq.s32.totalorder %s25, 0
      %p94 = por %p92, %p93
      %s96 = sadd.s32 %s95, 1
      %p99 = scmp.eq.s32.totalorder %s19, 1
      %p100 = scmp.ne.s32.totalorder %s95, %s97
      %p101 = scmp.eq.s32.totalorder %s19, 0
      %p102 = por %p100, %p101
      %p103 = scmp.ne.s32.totalorder %s95, %s97
      %p104 = scmp.eq.s32.totalorder %s24, 1
      %p105 = por %p103, %p104
      %p106 = scmp.ne.s32.totalorder %s97, %s98
      %p107 = scmp.eq.s32.totalorder %s24, 0
      %p108 = por %p106, %p107
      %p109 = scmp.ne.s32.totalorder %s97, %s98
      %p110 = scmp.eq.s32.totalorder %s25, 1
      %p111 = por %p109, %p110
      %p113 = scmp.ne.s32.totalorder %s98, %s112
      %p114 = scmp.eq.s32.totalorder %s25, 0
      %p115 = por %p113, %p114
      %s117 = sadd.s32 %s116, 1
      %p120 = scmp.eq.s32.totalorder %s19, 1
      %p121 = scmp.ne.s32.totalorder %s116, %s118
      %p122 = scmp.eq.s32.totalorder %s19, 0
      %p123 = por %p121, %p122
      %p124 = scmp.ne.s32.totalorder %s116, %s118
      %p125 = scmp.eq.s32.totalorder %s24, 1
      %p126 = por %p124, %p125
      %p127 = scmp.ne.s32.totalorder %s118, %s119
      %p128 = scmp.eq.s32.totalorder %s24, 0
      %p129 = por %p127, %p128
      %p130 = scmp.ne.s32.totalorder %s118, %s119
      %p131 = scmp.eq.s32.totalorder %s25, 1
      %p132 = por %p130, %p131
      %p134 = scmp.ne.s32.totalorder %s119, %s133
      %p135 = scmp.eq.s32.totalorder %s25, 0
      %p136 = por %p134, %p135
      %s138 = sadd.s32 %s137, 1
      %p141 = scmp.eq.s32.totalorder %s19, 1
      %p142 = scmp.ne.s32.totalorder %s137, %s139
      %p143 = scmp.eq.s32.totalorder %s19, 0
      %p144 = por %p142, %p143
      %p145 = scmp.ne.s32.totalorder %s137, %s139
      %p146 = scmp.eq.s32.totalorder %s24, 1
      %p147 = por %p145, %p146
      %p148 = scmp.ne.s32.totalorder %s139, %s140
      %p149 = scmp.eq.s32.totalorder %s24, 0
      %p150 = por %p148, %p149
      %p151 = scmp.ne.s32.totalorder %s139, %s140
      %p152 = scmp.eq.s32.totalorder %s25, 1
      %p153 = por %p151, %p152
      %p155 = scmp.ne.s32.totalorder %s140, %s154
      %p156 = scmp.eq.s32.totalorder %s25, 0
      %p157 = por %p155, %p156
      %s159 = sadd.s32 %s158, 1
      %p162 = scmp.eq.s32.totalorder %s19, 1
      %p163 = scmp.ne.s32.totalorder %s158, %s160
      %p164 = scmp.eq.s32.totalorder %s19, 0
      %p165 = por %p163, %p164
      %p166 = scmp.ne.s32.totalorder %s158, %s160
      %p167 = scmp.eq.s32.totalorder %s24, 1
      %p168 = por %p166, %p167
      %p169 = scmp.ne.s32.totalorder %s160, %s161
      %p170 = scmp.eq.s32.totalorder %s24, 0
      %p171 = por %p169, %p170
      %p172 = scmp.ne.s32.totalorder %s160, %s161
      %p173 = scmp.eq.s32.totalorder %s25, 1
      %p174 = por %p172, %p173
      %p176 = scmp.ne.s32.totalorder %s161, %s175
      %p177 = scmp.eq.s32.totalorder %s25, 0
      %p178 = por %p176, %p177
      %s180 = sadd.s32 %s179, 1
      %p183 = scmp.eq.s32.totalorder %s19, 1
      %p184 = scmp.ne.s32.totalorder %s179, %s181
      %p185 = scmp.eq.s32.totalorder %s19, 0
      %p186 = por %p184, %p185
      %p187 = scmp.ne.s32.totalorder %s179, %s181
      %p188 = scmp.eq.s32.totalorder %s24, 1
      %p189 = por %p187, %p188
      %p190 = scmp.ne.s32.totalorder %s181, %s182
      %p191 = scmp.eq.s32.totalorder %s24, 0
      %p192 = por %p190, %p191
      %p193 = scmp.ne.s32.totalorder %s181, %s182
      %p194 = scmp.eq.s32.totalorder %s25, 1
      %p195 = por %p193, %p194
      %p197 = scmp.ne.s32.totalorder %s182, %s196
      %p198 = scmp.eq.s32.totalorder %s25, 0
      %p199 = por %p197, %p198
      %s200 = ssub.s32 %s19, %s26
      %p201 = scmp.eq.s32.totalorder %s200, 0
      %s203 = sadd.s32 %s202, 1
      %s204 = scalar_select %p201, %s202, %s203
      %p207 = pneg %p201
      %p208 = scmp.eq.s32.totalorder %s19, 1
      %p209 = por %p207, %p208
      %p210 = scmp.ne.s32.totalorder %s202, %s205
      %p211 = scmp.eq.s32.totalorder %s19, 0
      %p212 = por %p210, %p211
      %p213 = scmp.ne.s32.totalorder %s202, %s205
      %p214 = scmp.eq.s32.totalorder %s24, 1
      %p215 = por %p213, %p214
      %p216 = scmp.ne.s32.totalorder %s205, %s206
      %p217 = scmp.eq.s32.totalorder %s24, 0
      %p218 = por %p216, %p217
      %p219 = scmp.ne.s32.totalorder %s205, %s206
      %p220 = scmp.eq.s32.totalorder %s25, 1
      %p221 = por %p219, %p220
      %p223 = scmp.ne.s32.totalorder %s206, %s222
      %p224 = scmp.eq.s32.totalorder %s25, 0
      %p225 = por %p223, %p224
      %p226 = scmp.le.s32.totalorder 1, %s19
      %p227 = scmp.lt.s32.totalorder %s19, 3
      %p228 = pnand %p226, %p227
      %p229 = pneg %p228
      // Predicated region
      $region9: #{tpu_custom_call.1} parent=5 // pred_check
        _
      $region10: #{tpu_custom_call.1} parent=5 // pred_check_branch
        %231 = sbr.rel (%p228) target = $region12
      $region11: #{tpu_custom_call.1} parent=5 // pred_region
        %s232 = ssub.s32 %s19, 1
        // Predicated region
        $region13: #{tpu_custom_call.1} parent=11 // pred_check
          %p233 = pneg %p66
        $region14: #{tpu_custom_call.1} parent=11 // pred_check_branch
          %235 = sbr.rel (%p233) target = $region16
        $region15: #{tpu_custom_call.1} parent=11 // pred_region
          _
        $region16: #{tpu_custom_call.1} parent=11 // pred_fallthru
          _
        // Predicated region
        $region17: #{tpu_custom_call.1} parent=11 // pred_check
          %p236 = pneg %p87
        $region18: #{tpu_custom_call.1} parent=11 // pred_check_branch
          %238 = sbr.rel (%p236) target = $region20
        $region19: #{tpu_custom_call.1} parent=11 // pred_region
          _
        $region20: #{tpu_custom_call.1} parent=11 // pred_fallthru
          _
        // Predicated region
        $region21: #{tpu_custom_call.1} parent=11 // pred_check
          %p239 = pneg %p108
        $region22: #{tpu_custom_call.1} parent=11 // pred_check_branch
          %241 = sbr.rel (%p239) target = $region24
        $region23: #{tpu_custom_call.1} parent=11 // pred_region
          _
        $region24: #{tpu_custom_call.1} parent=11 // pred_fallthru
          _
        // Predicated region
        $region25: #{tpu_custom_call.1} parent=11 // pred_check
          %p242 = pneg %p129
        $region26: #{tpu_custom_call.1} parent=11 // pred_check_branch
          %244 = sbr.rel (%p242) target = $region28
        $region27: #{tpu_custom_call.1} parent=11 // pred_region
          %s246 = ssub.s32 3072, 3072
          %247 = vsyncadd [#allocation6], %s246
          %s248 = sshll.u32 [#allocation5], 4
          %s249 = int_to_ptr.vmem [resolvable:$true] %s248
          %254 = dma.hbm_to_vmem [thread:$0]  %s4, 3072, %s249, [#allocation6], 192, 192, 12
        $region28: #{tpu_custom_call.1} parent=11 // pred_fallthru
          _
        // Predicated region
        $region29: #{tpu_custom_call.1} parent=11 // pred_check
          %p255 = pneg %p150
        $region30: #{tpu_custom_call.1} parent=11 // pred_check_branch
          %257 = sbr.rel (%p255) target = $region32
        $region31: #{tpu_custom_call.1} parent=11 // pred_region
          _
        $region32: #{tpu_custom_call.1} parent=11 // pred_fallthru
          _
        // Predicated region
        $region33: #{tpu_custom_call.1} parent=11 // pred_check
          %p258 = pneg %p171
        $region34: #{tpu_custom_call.1} parent=11 // pred_check_branch
          %260 = sbr.rel (%p258) target = $region36
        $region35: #{tpu_custom_call.1} parent=11 // pred_region
          %s262 = ssub.s32 1024, 1024
          %263 = vsyncadd [#allocation9], %s262
          %s264 = sshll.u32 [#allocation8], 4
          %s265 = int_to_ptr.vmem [resolvable:$true] %s264
          %270 = dma.hbm_to_vmem [thread:$0]  %s6, 1024, %s265, [#allocation9], 64, 64, 4
        $region36: #{tpu_custom_call.1} parent=11 // pred_fallthru
          _
        // Predicated region
        $region37: #{tpu_custom_call.1} parent=11 // pred_check
          %p271 = pneg %p192
        $region38: #{tpu_custom_call.1} parent=11 // pred_check_branch
          %273 = sbr.rel (%p271) target = $region40
        $region39: #{tpu_custom_call.1} parent=11 // pred_region
          _
        $region40: #{tpu_custom_call.1} parent=11 // pred_fallthru
          _
      $region12: #{tpu_custom_call.1} parent=5 // pred_fallthru
        _
      %p274 = scmp.lt.s32.totalorder %s19, 2
      // Predicated region
      $region41: #{tpu_custom_call.1} parent=5 // pred_check
        %p275 = pneg %p274
      $region42: #{tpu_custom_call.1} parent=5 // pred_check_branch
        %277 = sbr.rel (%p275) target = $region44
      $region43: #{tpu_custom_call.1} parent=5 // pred_region
        // Predicated region
        $region45: #{tpu_custom_call.1} parent=43 // pred_check
          %p278 = pneg %p39
        $region46: #{tpu_custom_call.1} parent=43 // pred_check_branch
          %280 = sbr.rel (%p278) target = $region48
        $region47: #{tpu_custom_call.1} parent=43 // pred_region
          %p281 = scmp.lt.s32.totalorder %s19, 1
          %s282 = scalar_select %p281, %s19, 1
          %s283 = smul.addr %s282, 8
          %s284 = smul.addr %s283, 8
          %s285 = scalar_lea.vmem %s0, %s284
        $region48: #{tpu_custom_call.1} parent=43 // pred_fallthru
          _
      $region44: #{tpu_custom_call.1} parent=5 // pred_fallthru
        _
      %p286 = scmp.le.s32.totalorder 1, %s19
      %p287 = scmp.lt.s32.totalorder %s19, 3
      %p288 = pnand %p286, %p287
      %p289 = pneg %p288
      // Predicated region
      $region49: #{tpu_custom_call.1} parent=5 // pred_check
        _
      $region50: #{tpu_custom_call.1} parent=5 // pred_check_branch
        %291 = sbr.rel (%p288) target = $region52
      $region51: #{tpu_custom_call.1} parent=5 // pred_region
        %s292 = ssub.s32 %s19, 1
        // Predicated region
        $region53: #{tpu_custom_call.1} parent=51 // pred_check
          %p293 = pneg %p129
        $region54: #{tpu_custom_call.1} parent=51 // pred_check_branch
          %295 = sbr.rel (%p293) target = $region56
        $region55: #{tpu_custom_call.1} parent=51 // pred_region
          %296 = dma.done [#allocation6], 3072
        $region56: #{tpu_custom_call.1} parent=51 // pred_fallthru
          _
        // Predicated region
        $region57: #{tpu_custom_call.1} parent=51 // pred_check
          %p297 = pneg %p171
        $region58: #{tpu_custom_call.1} parent=51 // pred_check_branch
          %299 = sbr.rel (%p297) target = $region60
        $region59: #{tpu_custom_call.1} parent=51 // pred_region
          %300 = dma.done [#allocation9], 1024
        $region60: #{tpu_custom_call.1} parent=51 // pred_fallthru
          _
        %p301 = scmp.lt.s32.totalorder %s24, 1
        %s302 = scalar_select %p301, %s24, 1
        %s303 = smul.addr %s302, 8
        %s304 = smul.addr %s303, 8
        %s305 = scalar_lea.vmem %s0, %s304
        %p306 = pneg %p45
        %p307 = pneg %p42
        %p308 = pneg %p66
        %p309 = pneg %p63
        %p310 = pneg %p87
        %p311 = pneg %p84
        %p312 = pneg %p108
        %p313 = pneg %p105
        %p314 = pneg %p129
        %p315 = pneg %p126
        %p316 = pneg %p150
        %p317 = pneg %p147
        %p318 = pneg %p171
        %p319 = pneg %p168
        %p320 = pneg %p192
        %p321 = pneg %p189
        %p322 = pneg %p218
        %p323 = pneg %p215
        %s324 = sand.u32 %s205, 1
        %s325 = scalar_lea.sflag [#allocation7], %s324
        %s326 = sand.u32 %s205, 1
        %s327 = smul.addr %s326, 64
        %s328 = scalar_lea.vmem [#allocation10], %s327
        %p329 = scmp.lt.s32.totalorder %s24, 1
        %s330 = scalar_select %p329, %s24, 1
        %s331 = smul.addr %s330, 8
        %s332 = smul.addr %s331, 8
        %s333 = scalar_lea.vmem %s0, %s332
        %v335 = vld [vmem:[%s1] sm:$0xff]
        %v336 = vld [vmem:[%s1 + $0x8] sm:$0xff]
        %v337 = vld [vmem:[%s1 + $0x10] sm:$0xff]
        %v338 = vld [vmem:[%s1 + $0x18] sm:$0xff]
        %v339 = vld [vmem:[%s1 + $0x20] sm:$0xff]
        %v340 = vld [vmem:[%s1 + $0x28] sm:$0xff]
        %v341 = vld [vmem:[%s1 + $0x30] sm:$0xff]
        %v342 = vld [vmem:[%s1 + $0x38] sm:$0xff]
        %v343 = vld [vmem:[%s1 + $0x40] sm:$0xff]
        %v344 = vld [vmem:[%s1 + $0x48] sm:$0xff]
        %v345 = vld [vmem:[%s1 + $0x50] sm:$0xff]
        %v346 = vld [vmem:[%s1 + $0x58] sm:$0xff]
        %v347 = vld [vmem:[%s1 + $0x60] sm:$0xff]
        %v348 = vld [vmem:[%s1 + $0x68] sm:$0xff]
        %v349 = vld [vmem:[%s1 + $0x70] sm:$0xff]
        %v350 = vld [vmem:[%s1 + $0x78] sm:$0xff]
        %v351 = vld [vmem:[%s333] sm:$0xff]
        %v352 = vld [vmem:[%s333 + $0x8] sm:$0xff]
        %v353 = vld [vmem:[%s333 + $0x10] sm:$0xff]
        %v354 = vld [vmem:[%s333 + $0x18] sm:$0xff]
        %v355 = vld [vmem:[%s333 + $0x20] sm:$0xff]
        %v356 = vld [vmem:[%s333 + $0x28] sm:$0xff]
        %v357 = vld [vmem:[%s333 + $0x30] sm:$0xff]
        %v358 = vld [vmem:[%s333 + $0x38] sm:$0xff]
        %v359 = vadd.f32 %v351, %v352
        %v360 = vadd.f32 %v359, %v353
        %v361 = vadd.f32 %v360, %v354
        %v362 = vadd.f32 %v361, %v355
        %v363 = vadd.f32 %v362, %v356
        %v364 = vadd.f32 %v363, %v357
        %v365 = vadd.f32 %v364, %v358
        %v366 = vrot.slane %v365, 4
        %v367 = vadd.f32 %v365, %v366
        %v368 = vrot.slane %v367, 2
        %v369 = vadd.f32 %v367, %v368
        %v370 = vrot.slane %v369, 1
        %v371 = vadd.f32 %v369, %v370
        %372 = vmatprep.subr.mxu0 0.0
        %373 = vmatpush1.msra.mxu0 %v335
        %374 = vmatprep.subr.mxu0 0.0
        %375 = vmatpush1.msra.mxu0 %v336
        %376 = vmatprep.subr.mxu0 0.0
        %377 = vmatpush1.msra.mxu0 %v337
        %378 = vmatprep.subr.mxu0 0.0
        %379 = vmatpush1.msra.mxu0 %v338
        %380 = vmatprep.subr.mxu0 0.0
        %381 = vmatpush1.msra.mxu0 %v339
        %382 = vmatprep.subr.mxu0 0.0
        %383 = vmatpush1.msra.mxu0 %v340
        %384 = vmatprep.subr.mxu0 0.0
        %385 = vmatpush1.msra.mxu0 %v341
        %386 = vmatprep.subr.mxu0 0.0
        %387 = vmatpush1.msra.mxu0 %v342
        %388 = vmatprep.subr.mxu0 0.0
        %389 = vmatpush1.msra.mxu0 %v343
        %390 = vmatprep.subr.mxu0 0.0
        %391 = vmatpush1.msra.mxu0 %v344
        %392 = vmatprep.subr.mxu0 0.0
        %393 = vmatpush1.msra.mxu0 %v345
        %394 = vmatprep.subr.mxu0 0.0
        %395 = vmatpush1.msra.mxu0 %v346
        %396 = vmatprep.subr.mxu0 0.0
        %397 = vmatpush1.msra.mxu0 %v347
        %398 = vmatprep.subr.mxu0 0.0
        %399 = vmatpush1.msra.mxu0 %v348
        %400 = vmatprep.subr.mxu0 0.0
        %401 = vmatpush1.msra.mxu0 %v349
        %402 = vmatprep.subr.mxu0 0.0
        %403 = vmatpush1.msra.mxu0 %v350
        %404 = vmatprep.subr.mxu0 0.0
        %405 = vmatpush1.msra.mxu0 0.0
        %406 = vmatprep.subr.mxu0 0.0
        %407 = vmatpush1.msra.mxu0 0.0
        %408 = vmatprep.subr.mxu0 0.0
        %409 = vmatpush1.msra.mxu0 0.0
        %410 = vmatprep.subr.mxu0 0.0
        %411 = vmatpush1.msra.mxu0 0.0
        %412 = vmatprep.subr.mxu0 0.0
        %413 = vmatpush1.msra.mxu0 0.0
        %414 = vmatprep.subr.mxu0 0.0
        %415 = vmatpush1.msra.mxu0 0.0
        %416 = vmatprep.subr.mxu0 0.0
        %417 = vmatpush1.msra.mxu0 0.0
        %418 = vmatprep.subr.mxu0 0.0
        %419 = vmatpush1.msra.mxu0 0.0
        %420 = vmatprep.subr.mxu0 0.0
        %421 = vmatpush1.msra.mxu0 0.0
        %422 = vmatprep.subr.mxu0 0.0
        %423 = vmatpush1.msra.mxu0 0.0
        %424 = vmatprep.subr.mxu0 0.0
        %425 = vmatpush1.msra.mxu0 0.0
        %426 = vmatprep.subr.mxu0 0.0
        %427 = vmatpush1.msra.mxu0 0.0
        %428 = vmatprep.subr.mxu0 0.0
        %429 = vmatpush1.msra.mxu0 0.0
        %430 = vmatprep.subr.mxu0 0.0
        %431 = vmatpush1.msra.mxu0 0.0
        %432 = vmatprep.subr.mxu0 0.0
        %433 = vmatpush1.msra.mxu0 0.0
        %434 = vmatprep.subr.mxu0 0.0
        %435 = vmatpush1.msra.mxu0 0.0
        %436 = vmatprep.mubr.f32.mxu0 0.0
        %437 = vmatmul.mubr.f32.gmra.mrb[0].mxu0 %v371
        %v438 = vpop.f32.mrb[0].mxu0
        %v439 = vadd.f32 0.0, %v438
        %v440 = vpop.f32.mrb[0].mxu0
        %441 = vdwg.mxu0
        %v442 = vrcp.pop 64.0
        %v443 = vmul.f32 %v439, %v442
        %vm444 = vcmask 261120
        %v446 = vsel %vm444, %v443, 0
        %v449 = vsel %vm444, %v335, 0
        %v452 = vsel %vm444, %v336, 0
        %v455 = vsel %vm444, %v337, 0
        %v458 = vsel %vm444, %v338, 0
        %v461 = vsel %vm444, %v339, 0
        %v464 = vsel %vm444, %v340, 0
        %v467 = vsel %vm444, %v341, 0
        %v470 = vsel %vm444, %v342, 0
        %v473 = vsel %vm444, %v343, 0
        %v476 = vsel %vm444, %v344, 0
        %v479 = vsel %vm444, %v345, 0
        %v482 = vsel %vm444, %v346, 0
        %v485 = vsel %vm444, %v347, 0
        %v488 = vsel %vm444, %v348, 0
        %v491 = vsel %vm444, %v349, 0
        %v494 = vsel %vm444, %v350, 0
        %496 = vmatprep.subr.mxu0 0.0
        %497 = vmatpush1.xpose.msra.mxu0 %v449
        %498 = vmatprep.subr.mxu0 0.0
        %499 = vmatpush1.xpose.msra.mxu0 %v452
        %500 = vmatprep.subr.mxu0 0.0
        %501 = vmatpush1.xpose.msra.mxu0 %v455
        %502 = vmatprep.subr.mxu0 0.0
        %503 = vmatpush1.xpose.msra.mxu0 %v458
        %504 = vmatprep.subr.mxu0 0.0
        %505 = vmatpush1.xpose.msra.mxu0 %v461
        %506 = vmatprep.subr.mxu0 0.0
        %507 = vmatpush1.xpose.msra.mxu0 %v464
        %508 = vmatprep.subr.mxu0 0.0
        %509 = vmatpush1.xpose.msra.mxu0 %v467
        %510 = vmatprep.subr.mxu0 0.0
        %511 = vmatpush1.xpose.msra.mxu0 %v470
        %512 = vmatprep.subr.mxu0 0.0
        %513 = vmatpush1.xpose.msra.mxu0 %v473
        %514 = vmatprep.subr.mxu0 0.0
        %515 = vmatpush1.xpose.msra.mxu0 %v476
        %516 = vmatprep.subr.mxu0 0.0
        %517 = vmatpush1.xpose.msra.mxu0 %v479
        %518 = vmatprep.subr.mxu0 0.0
        %519 = vmatpush1.xpose.msra.mxu0 %v482
        %520 = vmatprep.subr.mxu0 0.0
        %521 = vmatpush1.xpose.msra.mxu0 %v485
        %522 = vmatprep.subr.mxu0 0.0
        %523 = vmatpush1.xpose.msra.mxu0 %v488
        %524 = vmatprep.subr.mxu0 0.0
        %525 = vmatpush1.xpose.msra.mxu0 %v491
        %526 = vmatprep.subr.mxu0 0.0
        %527 = vmatpush1.xpose.msra.mxu0 %v494
        %528 = vmatprep.subr.mxu0 0.0
        %529 = vmatpush1.xpose.msra.mxu0 0.0
        %530 = vmatprep.subr.mxu0 0.0
        %531 = vmatpush1.xpose.msra.mxu0 0.0
        %532 = vmatprep.subr.mxu0 0.0
        %533 = vmatpush1.xpose.msra.mxu0 0.0
        %534 = vmatprep.subr.mxu0 0.0
        %535 = vmatpush1.xpose.msra.mxu0 0.0
        %536 = vmatprep.subr.mxu0 0.0
        %537 = vmatpush1.xpose.msra.mxu0 0.0
        %538 = vmatprep.subr.mxu0 0.0
        %539 = vmatpush1.xpose.msra.mxu0 0.0
        %540 = vmatprep.subr.mxu0 0.0
        %541 = vmatpush1.xpose.msra.mxu0 0.0
        %542 = vmatprep.subr.mxu0 0.0
        %543 = vmatpush1.xpose.msra.mxu0 0.0
        %544 = vmatprep.subr.mxu0 0.0
        %545 = vmatpush1.xpose.msra.mxu0 0.0
        %546 = vmatprep.subr.mxu0 0.0
        %547 = vmatpush1.xpose.msra.mxu0 0.0
        %548 = vmatprep.subr.mxu0 0.0
        %549 = vmatpush1.xpose.msra.mxu0 0.0
        %550 = vmatprep.subr.mxu0 0.0
        %551 = vmatpush1.xpose.msra.mxu0 0.0
        %552 = vmatprep.subr.mxu0 0.0
        %553 = vmatpush1.xpose.msra.mxu0 0.0
        %554 = vmatprep.subr.mxu0 0.0
        %555 = vmatpush1.xpose.msra.mxu0 0.0
        %556 = vmatprep.subr.mxu0 0.0
        %557 = vmatpush1.xpose.msra.mxu0 0.0
        %558 = vmatprep.subr.mxu0 0.0
        %559 = vmatpush1.xpose.msra.mxu0 0.0
        %560 = vmatprep.mubr.f32.mxu0 0.0
        %561 = vmatmul.mubr.f32.gmra.mrb[0].mxu0 %v446
        %v562 = vpop.f32.mrb[0].mxu0
        %v563 = vadd.f32 0.0, %v562
        %v564 = vpop.f32.mrb[0].mxu0
        %565 = vdwg.mxu0
        %v566 = vlaneseq
        %v567 = vshrl.u32 %v566, 7
        %v568 = vsub.s32 0, %v567
        %v569 = vrot.slane %v563, %v568
        %v570 = vsub.f32 %v351, %v569
        %v571 = vsub.f32 %v352, %v569
        %v572 = vsub.f32 %v353, %v569
        %v573 = vsub.f32 %v354, %v569
        %v574 = vsub.f32 %v355, %v569
        %v575 = vsub.f32 %v356, %v569
        %v576 = vsub.f32 %v357, %v569
        %v577 = vsub.f32 %v358, %v569
        %v578 = vmul.f32 %v570, %v570
        %v579 = vmul.f32 %v571, %v571
        %v580 = vmul.f32 %v572, %v572
        %v581 = vmul.f32 %v573, %v573
        %v582 = vmul.f32 %v574, %v574
        %v583 = vmul.f32 %v575, %v575
        %v584 = vmul.f32 %v576, %v576
        %v585 = vmul.f32 %v577, %v577
        %v586 = vadd.f32 %v578, %v579
        %v587 = vadd.f32 %v586, %v580
        %v588 = vadd.f32 %v587, %v581
        %v589 = vadd.f32 %v588, %v582
        %v590 = vadd.f32 %v589, %v583
        %v591 = vadd.f32 %v590, %v584
        %v592 = vadd.f32 %v591, %v585
        %v593 = vrot.slane %v592, 4
        %v594 = vadd.f32 %v592, %v593
        %v595 = vrot.slane %v594, 2
        %v596 = vadd.f32 %v594, %v595
        %v597 = vrot.slane %v596, 1
        %v598 = vadd.f32 %v596, %v597
        %599 = vmatprep.subr.mxu0 0.0
        %600 = vmatpush1.msra.mxu0 %v335
        %601 = vmatprep.subr.mxu0 0.0
        %602 = vmatpush1.msra.mxu0 %v336
        %603 = vmatprep.subr.mxu0 0.0
        %604 = vmatpush1.msra.mxu0 %v337
        %605 = vmatprep.subr.mxu0 0.0
        %606 = vmatpush1.msra.mxu0 %v338
        %607 = vmatprep.subr.mxu0 0.0
        %608 = vmatpush1.msra.mxu0 %v339
        %609 = vmatprep.subr.mxu0 0.0
        %610 = vmatpush1.msra.mxu0 %v340
        %611 = vmatprep.subr.mxu0 0.0
        %612 = vmatpush1.msra.mxu0 %v341
        %613 = vmatprep.subr.mxu0 0.0
        %614 = vmatpush1.msra.mxu0 %v342
        %615 = vmatprep.subr.mxu0 0.0
        %616 = vmatpush1.msra.mxu0 %v343
        %617 = vmatprep.subr.mxu0 0.0
        %618 = vmatpush1.msra.mxu0 %v344
        %619 = vmatprep.subr.mxu0 0.0
        %620 = vmatpush1.msra.mxu0 %v345
        %621 = vmatprep.subr.mxu0 0.0
        %622 = vmatpush1.msra.mxu0 %v346
        %623 = vmatprep.subr.mxu0 0.0
        %624 = vmatpush1.msra.mxu0 %v347
        %625 = vmatprep.subr.mxu0 0.0
        %626 = vmatpush1.msra.mxu0 %v348
        %627 = vmatprep.subr.mxu0 0.0
        %628 = vmatpush1.msra.mxu0 %v349
        %629 = vmatprep.subr.mxu0 0.0
        %630 = vmatpush1.msra.mxu0 %v350
        %631 = vmatprep.subr.mxu0 0.0
        %632 = vmatpush1.msra.mxu0 0.0
        %633 = vmatprep.subr.mxu0 0.0
        %634 = vmatpush1.msra.mxu0 0.0
        %635 = vmatprep.subr.mxu0 0.0
        %636 = vmatpush1.msra.mxu0 0.0
        %637 = vmatprep.subr.mxu0 0.0
        %638 = vmatpush1.msra.mxu0 0.0
        %639 = vmatprep.subr.mxu0 0.0
        %640 = vmatpush1.msra.mxu0 0.0
        %641 = vmatprep.subr.mxu0 0.0
        %642 = vmatpush1.msra.mxu0 0.0
        %643 = vmatprep.subr.mxu0 0.0
        %644 = vmatpush1.msra.mxu0 0.0
        %645 = vmatprep.subr.mxu0 0.0
        %646 = vmatpush1.msra.mxu0 0.0
        %647 = vmatprep.subr.mxu0 0.0
        %648 = vmatpush1.msra.mxu0 0.0
        %649 = vmatprep.subr.mxu0 0.0
        %650 = vmatpush1.msra.mxu0 0.0
        %651 = vmatprep.subr.mxu0 0.0
        %652 = vmatpush1.msra.mxu0 0.0
        %653 = vmatprep.subr.mxu0 0.0
        %654 = vmatpush1.msra.mxu0 0.0
        %655 = vmatprep.subr.mxu0 0.0
        %656 = vmatpush1.msra.mxu0 0.0
        %657 = vmatprep.subr.mxu0 0.0
        %658 = vmatpush1.msra.mxu0 0.0
        %659 = vmatprep.subr.mxu0 0.0
        %660 = vmatpush1.msra.mxu0 0.0
        %661 = vmatprep.subr.mxu0 0.0
        %662 = vmatpush1.msra.mxu0 0.0
        %663 = vmatprep.mubr.f32.mxu0 0.0
        %664 = vmatmul.mubr.f32.gmra.mrb[0].mxu0 %v598
        %v665 = vpop.f32.mrb[0].mxu0
        %v666 = vadd.f32 0.0, %v665
        %v667 = vpop.f32.mrb[0].mxu0
        %668 = vdwg.mxu0
        %v669 = vmul.f32 %v666, %v442
        %v670 = vadd.f32 %v669, 1e-05
        %v671 = vrsqrt.pop %v670
        %v673 = vsel %vm444, %v671, 0
        %675 = vmatprep.subr.mxu0 0.0
        %676 = vmatpush1.xpose.msra.mxu0 %v449
        %677 = vmatprep.subr.mxu0 0.0
        %678 = vmatpush1.xpose.msra.mxu0 %v452
        %679 = vmatprep.subr.mxu0 0.0
        %680 = vmatpush1.xpose.msra.mxu0 %v455
        %681 = vmatprep.subr.mxu0 0.0
        %682 = vmatpush1.xpose.msra.mxu0 %v458
        %683 = vmatprep.subr.mxu0 0.0
        %684 = vmatpush1.xpose.msra.mxu0 %v461
        %685 = vmatprep.subr.mxu0 0.0
        %686 = vmatpush1.xpose.msra.mxu0 %v464
        %687 = vmatprep.subr.mxu0 0.0
        %688 = vmatpush1.xpose.msra.mxu0 %v467
        %689 = vmatprep.subr.mxu0 0.0
        %690 = vmatpush1.xpose.msra.mxu0 %v470
        %691 = vmatprep.subr.mxu0 0.0
        %692 = vmatpush1.xpose.msra.mxu0 %v473
        %693 = vmatprep.subr.mxu0 0.0
        %694 = vmatpush1.xpose.msra.mxu0 %v476
        %695 = vmatprep.subr.mxu0 0.0
        %696 = vmatpush1.xpose.msra.mxu0 %v479
        %697 = vmatprep.subr.mxu0 0.0
        %698 = vmatpush1.xpose.msra.mxu0 %v482
        %699 = vmatprep.subr.mxu0 0.0
        %700 = vmatpush1.xpose.msra.mxu0 %v485
        %701 = vmatprep.subr.mxu0 0.0
        %702 = vmatpush1.xpose.msra.mxu0 %v488
        %703 = vmatprep.subr.mxu0 0.0
        %704 = vmatpush1.xpose.msra.mxu0 %v491
        %705 = vmatprep.subr.mxu0 0.0
        %706 = vmatpush1.xpose.msra.mxu0 %v494
        %707 = vmatprep.subr.mxu0 0.0
        %708 = vmatpush1.xpose.msra.mxu0 0.0
        %709 = vmatprep.subr.mxu0 0.0
        %710 = vmatpush1.xpose.msra.mxu0 0.0
        %711 = vmatprep.subr.mxu0 0.0
        %712 = vmatpush1.xpose.msra.mxu0 0.0
        %713 = vmatprep.subr.mxu0 0.0
        %714 = vmatpush1.xpose.msra.mxu0 0.0
        %715 = vmatprep.subr.mxu0 0.0
        %716 = vmatpush1.xpose.msra.mxu0 0.0
        %717 = vmatprep.subr.mxu0 0.0
        %718 = vmatpush1.xpose.msra.mxu0 0.0
        %719 = vmatprep.subr.mxu0 0.0
        %720 = vmatpush1.xpose.msra.mxu0 0.0
        %721 = vmatprep.subr.mxu0 0.0
        %722 = vmatpush1.xpose.msra.mxu0 0.0
        %723 = vmatprep.subr.mxu0 0.0
        %724 = vmatpush1.xpose.msra.mxu0 0.0
        %725 = vmatprep.subr.mxu0 0.0
        %726 = vmatpush1.xpose.msra.mxu0 0.0
        %727 = vmatprep.subr.mxu0 0.0
        %728 = vmatpush1.xpose.msra.mxu0 0.0
        %729 = vmatprep.subr.mxu0 0.0
        %730 = vmatpush1.xpose.msra.mxu0 0.0
        %731 = vmatprep.subr.mxu0 0.0
        %732 = vmatpush1.xpose.msra.mxu0 0.0
        %733 = vmatprep.subr.mxu0 0.0
        %734 = vmatpush1.xpose.msra.mxu0 0.0
        %735 = vmatprep.subr.mxu0 0.0
        %736 = vmatpush1.xpose.msra.mxu0 0.0
        %737 = vmatprep.subr.mxu0 0.0
        %738 = vmatpush1.xpose.msra.mxu0 0.0
        %739 = vmatprep.mubr.f32.mxu0 0.0
        %740 = vmatmul.mubr.f32.gmra.mrb[0].mxu0 %v673
        %v741 = vpop.f32.mrb[0].mxu0
        %v742 = vadd.f32 0.0, %v741
        %v743 = vpop.f32.mrb[0].mxu0
        %744 = vdwg.mxu0
        %v745 = vld [vmem:[%s2] sm:$0x1]
        %v746 = vmul.f32 %v742, %v745
        %v747 = vld [vmem:[%s3] sm:$0x1]
        %v748 = vmul.f32 %v563, %v746
        %v749 = vsub.f32 %v747, %v748
        %v750 = vlaneseq
        %v751 = vshrl.u32 %v750, 7
        %v752 = vsub.s32 0, %v751
        %v753 = vrot.slane %v746, %v752
        %v754 = vmul.f32 %v351, %v753
        %v755 = vmul.f32 %v352, %v753
        %v756 = vmul.f32 %v353, %v753
        %v757 = vmul.f32 %v354, %v753
        %v758 = vmul.f32 %v355, %v753
        %v759 = vmul.f32 %v356, %v753
        %v760 = vmul.f32 %v357, %v753
        %v761 = vmul.f32 %v358, %v753
        %v763 = vlaneseq
        %v764 = vshrl.u32 %v763, 7
        %v765 = vsub.s32 0, %v764
        %v766 = vrot.slane %v749, %v765
        %v768 = vadd.f32 %v754, %v766
        %v769 = vadd.f32 %v755, %v766
        %v770 = vadd.f32 %v756, %v766
        %v771 = vadd.f32 %v757, %v766
        %v772 = vadd.f32 %v758, %v766
        %v773 = vadd.f32 %v759, %v766
        %v774 = vadd.f32 %v760, %v766
        %v775 = vadd.f32 %v761, %v766
        %v776 = vpack.c.bf16 %v769, %v768
        %v777 = vpack.c.bf16 %v771, %v770
        %v778 = vpack.c.bf16 %v773, %v772
        %v779 = vpack.c.bf16 %v775, %v774
        %v780 = vld [vmem:[#allocation5] sm:$0xff]
        %v781 = vld [vmem:[#allocation5 + $0x8] sm:$0xf]
        %v782 = vld [vmem:[#allocation5 + $0xc] sm:$0xff]
        %v783 = vld [vmem:[#allocation5 + $0x14] sm:$0xf]
        %v784 = vld [vmem:[#allocation5 + $0x18] sm:$0xff]
        %v785 = vld [vmem:[#allocation5 + $0x20] sm:$0xf]
        %v786 = vld [vmem:[#allocation5 + $0x24] sm:$0xff]
        %v787 = vld [vmem:[#allocation5 + $0x2c] sm:$0xf]
        %v788 = vld [vmem:[#allocation5 + $0x30] sm:$0xff]
        %v789 = vld [vmem:[#allocation5 + $0x38] sm:$0xf]
        %v790 = vld [vmem:[#allocation5 + $0x3c] sm:$0xff]
        %v791 = vld [vmem:[#allocation5 + $0x44] sm:$0xf]
        %v792 = vld [vmem:[#allocation5 + $0x48] sm:$0xff]
        %v793 = vld [vmem:[#allocation5 + $0x50] sm:$0xf]
        %v794 = vld [vmem:[#allocation5 + $0x54] sm:$0xff]
        %v795 = vld [vmem:[#allocation5 + $0x5c] sm:$0xf]
        %v796 = vld [vmem:[#allocation5 + $0x60] sm:$0xff]
        %v797 = vld [vmem:[#allocation5 + $0x68] sm:$0xf]
        %v798 = vld [vmem:[#allocation5 + $0x6c] sm:$0xff]
        %v799 = vld [vmem:[#allocation5 + $0x74] sm:$0xf]
        %v800 = vld [vmem:[#allocation5 + $0x78] sm:$0xff]
        %v801 = vld [vmem:[#allocation5 + $0x80] sm:$0xf]
        %v802 = vld [vmem:[#allocation5 + $0x84] sm:$0xff]
        %v803 = vld [vmem:[#allocation5 + $0x8c] sm:$0xf]
        %v804 = vld [vmem:[#allocation5 + $0x90] sm:$0xff]
        %v805 = vld [vmem:[#allocation5 + $0x98] sm:$0xf]
        %v806 = vld [vmem:[#allocation5 + $0x9c] sm:$0xff]
        %v807 = vld [vmem:[#allocation5 + $0xa4] sm:$0xf]
        %v808 = vld [vmem:[#allocation5 + $0xa8] sm:$0xff]
        %v809 = vld [vmem:[#allocation5 + $0xb0] sm:$0xf]
        %v810 = vld [vmem:[#allocation5 + $0xb4] sm:$0xff]
        %v811 = vld [vmem:[#allocation5 + $0xbc] sm:$0xf]
        %v812 = vld [vmem:[%s5] sm:$0x7]
        %v814 = vlaneseq
        %v815 = vshrl.u32 %v814, 7
        %v816 = vsub.s32 0, %v815
        %v817 = vrot.slane %v812, %v816
        %v818 = vlaneseq
        %v819 = vshrl.u32 %v818, 7
        %v820 = vsub.s32 1, %v819
        %v821 = vrot.slane %v812, %v820
        %v822 = vlaneseq
        %v823 = vshrl.u32 %v822, 7
        %v824 = vsub.s32 2, %v823
        %v825 = vrot.slane %v812, %v824
        %v861 = vunpack.c.l.b16 %v780
        %v862 = vunpack.c.h.b16 %v780
        %v863 = vunpack.c.l.b16 %v781
        %v864 = vunpack.c.l.b16 %v782
        %v865 = vunpack.c.h.b16 %v782
        %v866 = vunpack.c.l.b16 %v783
        %v867 = vunpack.c.l.b16 %v784
        %v868 = vunpack.c.h.b16 %v784
        %v869 = vunpack.c.l.b16 %v785
        %v870 = vunpack.c.l.b16 %v786
        %v871 = vunpack.c.h.b16 %v786
        %v872 = vunpack.c.l.b16 %v787
        %v873 = vunpack.c.l.b16 %v788
        %v874 = vunpack.c.h.b16 %v788
        %v875 = vunpack.c.l.b16 %v789
        %v876 = vunpack.c.l.b16 %v790
        %v877 = vunpack.c.h.b16 %v790
        %v878 = vunpack.c.l.b16 %v791
        %v879 = vunpack.c.l.b16 %v792
        %v880 = vunpack.c.h.b16 %v792
        %v881 = vunpack.c.l.b16 %v793
        %v882 = vunpack.c.l.b16 %v794
        %v883 = vunpack.c.h.b16 %v794
        %v884 = vunpack.c.l.b16 %v795
        %v885 = vunpack.c.l.b16 %v796
        %v886 = vunpack.c.h.b16 %v796
        %v887 = vunpack.c.l.b16 %v797
        %v888 = vunpack.c.l.b16 %v798
        %v889 = vunpack.c.h.b16 %v798
        %v890 = vunpack.c.l.b16 %v799
        %v891 = vunpack.c.l.b16 %v800
        %v892 = vunpack.c.h.b16 %v800
        %v893 = vunpack.c.l.b16 %v801
        %v894 = vunpack.c.l.b16 %v802
        %v895 = vunpack.c.h.b16 %v802
        %v896 = vunpack.c.l.b16 %v803
        %v897 = vunpack.c.l.b16 %v804
        %v898 = vunpack.c.h.b16 %v804
        %v899 = vunpack.c.l.b16 %v805
        %v900 = vunpack.c.l.b16 %v806
        %v901 = vunpack.c.h.b16 %v806
        %v902 = vunpack.c.l.b16 %v807
        %v903 = vunpack.c.l.b16 %v808
        %v904 = vunpack.c.h.b16 %v808
        %v905 = vunpack.c.l.b16 %v809
        %v906 = vunpack.c.l.b16 %v810
        %v907 = vunpack.c.h.b16 %v810
        %v908 = vunpack.c.l.b16 %v811
        %v909 = vpack.c.b16 %v864, %v861
        %v910 = vpack.c.b16 %v865, %v862
        %v911 = vpack.c.b16 %v866, %v863
        %v912 = vpack.c.b16 %v870, %v867
        %v913 = vpack.c.b16 %v871, %v868
        %v914 = vpack.c.b16 %v872, %v869
        %v915 = vpack.c.b16 %v876, %v873
        %v916 = vpack.c.b16 %v877, %v874
        %v917 = vpack.c.b16 %v878, %v875
        %v918 = vpack.c.b16 %v882, %v879
        %v919 = vpack.c.b16 %v883, %v880
        %v920 = vpack.c.b16 %v884, %v881
        %v921 = vpack.c.b16 %v888, %v885
        %v922 = vpack.c.b16 %v889, %v886
        %v923 = vpack.c.b16 %v890, %v887
        %v924 = vpack.c.b16 %v894, %v891
        %v925 = vpack.c.b16 %v895, %v892
        %v926 = vpack.c.b16 %v896, %v893
        %v927 = vpack.c.b16 %v900, %v897
        %v928 = vpack.c.b16 %v901, %v898
        %v929 = vpack.c.b16 %v902, %v899
        %v930 = vpack.c.b16 %v906, %v903
        %v931 = vpack.c.b16 %v907, %v904
        %v932 = vpack.c.b16 %v908, %v905
        %957 = vmatprep.subr.bf16.mxu0 %v910
        %958 = vmatpush1.bf16.msra.mxu0 %v909
        %959 = vmatprep.subr.bf16.mxu0 %v913
        %960 = vmatpush1.bf16.msra.mxu0 %v912
        %961 = vmatprep.subr.bf16.mxu0 %v916
        %962 = vmatpush1.bf16.msra.mxu0 %v915
        %963 = vmatprep.subr.bf16.mxu0 %v919
        %964 = vmatpush1.bf16.msra.mxu0 %v918
        %965 = vmatprep.subr.bf16.mxu0 %v922
        %966 = vmatpush1.bf16.msra.mxu0 %v921
        %967 = vmatprep.subr.bf16.mxu0 %v925
        %968 = vmatpush1.bf16.msra.mxu0 %v924
        %969 = vmatprep.subr.bf16.mxu0 %v928
        %970 = vmatpush1.bf16.msra.mxu0 %v927
        %971 = vmatprep.subr.bf16.mxu0 %v931
        %972 = vmatpush1.bf16.msra.mxu0 %v930
        %973 = vmatprep.subr.bf16.mxu0 0
        %974 = vmatpush1.bf16.msra.mxu0 0
        %975 = vmatprep.subr.bf16.mxu0 0
        %976 = vmatpush1.bf16.msra.mxu0 0
        %977 = vmatprep.subr.bf16.mxu0 0
        %978 = vmatpush1.bf16.msra.mxu0 0
        %979 = vmatprep.subr.bf16.mxu0 0
        %980 = vmatpush1.bf16.msra.mxu0 0
        %981 = vmatprep.subr.bf16.mxu0 0
        %982 = vmatpush1.bf16.msra.mxu0 0
        %983 = vmatprep.subr.bf16.mxu0 0
        %984 = vmatpush1.bf16.msra.mxu0 0
        %985 = vmatprep.subr.bf16.mxu0 0
        %986 = vmatpush1.bf16.msra.mxu0 0
        %987 = vmatprep.subr.bf16.mxu0 0
        %988 = vmatpush1.bf16.msra.mxu0 0
        %989 = vmatprep.mubr.bf16.mxu0 0
        %990 = vmatmul.mubr.bf16.gmra.mrb[0].mxu0 %v776
        %v991 = vpop.f32.mrb[0].mxu0
        %v992 = vadd.f32 %v817, %v991
        %v993 = vpop.f32.mrb[0].mxu0
        %v994 = vadd.f32 %v821, %v993
        %v995 = vpop.f32.mrb[0].mxu0
        %v996 = vadd.f32 %v817, %v995
        %v997 = vpop.f32.mrb[0].mxu0
        %v998 = vadd.f32 %v821, %v997
        %999 = vmatprep.mubr.bf16.mxu0 0
        %1000 = vmatmul.mubr.bf16.gmra.mrb[0].mxu0 %v777
        %v1001 = vpop.f32.mrb[0].mxu0
        %v1002 = vadd.f32 %v817, %v1001
        %v1003 = vpop.f32.mrb[0].mxu0
        %v1004 = vadd.f32 %v821, %v1003
        %v1005 = vpop.f32.mrb[0].mxu0
        %v1006 = vadd.f32 %v817, %v1005
        %v1007 = vpop.f32.mrb[0].mxu0
        %v1008 = vadd.f32 %v821, %v1007
        %1009 = vmatprep.mubr.bf16.mxu0 0
        %1010 = vmatmul.mubr.bf16.gmra.mrb[0].mxu0 %v778
        %v1011 = vpop.f32.mrb[0].mxu0
        %v1012 = vadd.f32 %v817, %v1011
        %v1013 = vpop.f32.mrb[0].mxu0
        %v1014 = vadd.f32 %v821, %v1013
        %v1015 = vpop.f32.mrb[0].mxu0
        %v1016 = vadd.f32 %v817, %v1015
        %v1017 = vpop.f32.mrb[0].mxu0
        %v1018 = vadd.f32 %v821, %v1017
        %1019 = vmatprep.mubr.bf16.mxu0 0
        %1020 = vmatmul.mubr.bf16.gmra.mrb[0].mxu0 %v779
        %v1021 = vpop.f32.mrb[0].mxu0
        %v1022 = vadd.f32 %v817, %v1021
        %v1023 = vpop.f32.mrb[0].mxu0
        %v1024 = vadd.f32 %v821, %v1023
        %v1025 = vpop.f32.mrb[0].mxu0
        %v1026 = vadd.f32 %v817, %v1025
        %v1027 = vpop.f32.mrb[0].mxu0
        %v1028 = vadd.f32 %v821, %v1027
        %1029 = vdwg.mxu0
        %1030 = vmatprep.subr.bf16.mxu0 0
        %1031 = vmatpush1.bf16.msra.mxu0 %v911
        %1032 = vmatprep.subr.bf16.mxu0 0
        %1033 = vmatpush1.bf16.msra.mxu0 %v914
        %1034 = vmatprep.subr.bf16.mxu0 0
        %1035 = vmatpush1.bf16.msra.mxu0 %v917
        %1036 = vmatprep.subr.bf16.mxu0 0
        %1037 = vmatpush1.bf16.msra.mxu0 %v920
        %1038 = vmatprep.subr.bf16.mxu0 0
        %1039 = vmatpush1.bf16.msra.mxu0 %v923
        %1040 = vmatprep.subr.bf16.mxu0 0
        %1041 = vmatpush1.bf16.msra.mxu0 %v926
        %1042 = vmatprep.subr.bf16.mxu0 0
        %1043 = vmatpush1.bf16.msra.mxu0 %v929
        %1044 = vmatprep.subr.bf16.mxu0 0
        %1045 = vmatpush1.bf16.msra.mxu0 %v932
        %1046 = vmatprep.subr.bf16.mxu0 0
        %1047 = vmatpush1.bf16.msra.mxu0 0
        %1048 = vmatprep.subr.bf16.mxu0 0
        %1049 = vmatpush1.bf16.msra.mxu0 0
        %1050 = vmatprep.subr.bf16.mxu0 0
        %1051 = vmatpush1.bf16.msra.mxu0 0
        %1052 = vmatprep.subr.bf16.mxu0 0
        %1053 = vmatpush1.bf16.msra.mxu0 0
        %1054 = vmatprep.subr.bf16.mxu0 0
        %1055 = vmatpush1.bf16.msra.mxu0 0
        %1056 = vmatprep.subr.bf16.mxu0 0
        %1057 = vmatpush1.bf16.msra.mxu0 0
        %1058 = vmatprep.subr.bf16.mxu0 0
        %1059 = vmatpush1.bf16.msra.mxu0 0
        %1060 = vmatprep.subr.bf16.mxu0 0
        %1061 = vmatpush1.bf16.msra.mxu0 0
        %1062 = vmatprep.mubr.bf16.mxu0 0
        %1063 = vmatmul.mubr.bf16.gmra.mrb[0].mxu0 %v776
        %v1064 = vpop.f32.mrb[0].mxu0
        %v1065 = vadd.f32 %v825, %v1064
        %v1066 = vpop.f32.mrb[0].mxu0
        %v1067 = vpop.f32.mrb[0].mxu0
        %v1068 = vadd.f32 %v825, %v1067
        %v1069 = vpop.f32.mrb[0].mxu0
        %1070 = vmatprep.mubr.bf16.mxu0 0
        %1071 = vmatmul.mubr.bf16.gmra.mrb[0].mxu0 %v777
        %v1072 = vpop.f32.mrb[0].mxu0
        %v1073 = vadd.f32 %v825, %v1072
        %v1074 = vpop.f32.mrb[0].mxu0
        %v1075 = vpop.f32.mrb[0].mxu0
        %v1076 = vadd.f32 %v825, %v1075
        %v1077 = vpop.f32.mrb[0].mxu0
        %1078 = vmatprep.mubr.bf16.mxu0 0
        %1079 = vmatmul.mubr.bf16.gmra.mrb[0].mxu0 %v778
        %v1080 = vpop.f32.mrb[0].mxu0
        %v1081 = vadd.f32 %v825, %v1080
        %v1082 = vpop.f32.mrb[0].mxu0
        %v1083 = vpop.f32.mrb[0].mxu0
        %v1084 = vadd.f32 %v825, %v1083
        %v1085 = vpop.f32.mrb[0].mxu0
        %1086 = vmatprep.mubr.bf16.mxu0 0
        %1087 = vmatmul.mubr.bf16.gmra.mrb[0].mxu0 %v779
        %v1088 = vpop.f32.mrb[0].mxu0
        %v1089 = vadd.f32 %v825, %v1088
        %v1090 = vpop.f32.mrb[0].mxu0
        %v1091 = vpop.f32.mrb[0].mxu0
        %v1092 = vadd.f32 %v825, %v1091
        %v1093 = vpop.f32.mrb[0].mxu0
        %1094 = vdwg.mxu0
        %v1095 = vpack.c.bf16 %v996, %v992
        %v1096 = vpack.c.bf16 %v1006, %v1002
        %v1097 = vpack.c.bf16 %v1016, %v1012
        %v1098 = vpack.c.bf16 %v1026, %v1022
        %1099 = vst [vmem:[#allocation2] sm:$0xff] %v1095
        %1100 = vst [vmem:[#allocation2 + $0x8] sm:$0xff] %v1096
        %1101 = vst [vmem:[#allocation2 + $0x10] sm:$0xff] %v1097
        %1102 = vst [vmem:[#allocation2 + $0x18] sm:$0xff] %v1098
        %v1103 = vpack.c.bf16 %v998, %v994
        %v1104 = vpack.c.bf16 %v1008, %v1004
        %v1105 = vpack.c.bf16 %v1018, %v1014
        %v1106 = vpack.c.bf16 %v1028, %v1024
        %1107 = vst [vmem:[#allocation3] sm:$0xff] %v1103
        %1108 = vst [vmem:[#allocation3 + $0x8] sm:$0xff] %v1104
        %1109 = vst [vmem:[#allocation3 + $0x10] sm:$0xff] %v1105
        %1110 = vst [vmem:[#allocation3 + $0x18] sm:$0xff] %v1106
        %v1111 = vpack.c.bf16 %v1068, %v1065
        %v1112 = vpack.c.bf16 %v1076, %v1073
        %v1113 = vpack.c.bf16 %v1084, %v1081
        %v1114 = vpack.c.bf16 %v1092, %v1089
        %1115 = vst [vmem:[#allocation4] sm:$0xff] %v1111
        %1116 = vst [vmem:[#allocation4 + $0x8] sm:$0xff] %v1112
        %1117 = vst [vmem:[#allocation4 + $0x10] sm:$0xff] %v1113
        %1118 = vst [vmem:[#allocation4 + $0x18] sm:$0xff] %v1114
        %v1119 = vld [vmem:[#allocation2] sm:$0xff]
        %v1120 = vld [vmem:[#allocation2 + $0x8] sm:$0xff]
        %v1121 = vld [vmem:[#allocation2 + $0x10] sm:$0xff]
        %v1122 = vld [vmem:[#allocation2 + $0x18] sm:$0xff]
        %v1123 = vld [vmem:[#allocation3] sm:$0xff]
        %v1124 = vld [vmem:[#allocation3 + $0x8] sm:$0xff]
        %v1125 = vld [vmem:[#allocation3 + $0x10] sm:$0xff]
        %v1126 = vld [vmem:[#allocation3 + $0x18] sm:$0xff]
        %v1127 = vld [vmem:[#allocation4] sm:$0xff]
        %v1128 = vld [vmem:[#allocation4 + $0x8] sm:$0xff]
        %v1129 = vld [vmem:[#allocation4 + $0x10] sm:$0xff]
        %v1130 = vld [vmem:[#allocation4 + $0x18] sm:$0xff]
        %v1132 = vsel %vm444, %v1119, 0
        %v1135 = vsel %vm444, %v1120, 0
        %v1138 = vsel %vm444, %v1121, 0
        %v1141 = vsel %vm444, %v1122, 0
        %v1144 = vsel %vm444, %v1123, 0
        %v1147 = vsel %vm444, %v1124, 0
        %v1150 = vsel %vm444, %v1125, 0
        %v1153 = vsel %vm444, %v1126, 0
        %1155 = vmatprep.subr.bf16.mxu0 0
        %1156 = vmatpush1.bf16.xpose.msra.mxu0 %v1144
        %1157 = vmatprep.subr.bf16.mxu0 0
        %1158 = vmatpush1.bf16.xpose.msra.mxu0 %v1147
        %1159 = vmatprep.subr.bf16.mxu0 0
        %1160 = vmatpush1.bf16.xpose.msra.mxu0 %v1150
        %1161 = vmatprep.subr.bf16.mxu0 0
        %1162 = vmatpush1.bf16.xpose.msra.mxu0 %v1153
        %1163 = vmatprep.subr.bf16.mxu0 0
        %1164 = vmatpush1.bf16.xpose.msra.mxu0 0
        %1165 = vmatprep.subr.bf16.mxu0 0
        %1166 = vmatpush1.bf16.xpose.msra.mxu0 0
        %1167 = vmatprep.subr.bf16.mxu0 0
        %1168 = vmatpush1.bf16.xpose.msra.mxu0 0
        %1169 = vmatprep.subr.bf16.mxu0 0
        %1170 = vmatpush1.bf16.xpose.msra.mxu0 0
        %1171 = vmatprep.subr.bf16.mxu0 0
        %1172 = vmatpush1.bf16.xpose.msra.mxu0 0
        %1173 = vmatprep.subr.bf16.mxu0 0
        %1174 = vmatpush1.bf16.xpose.msra.mxu0 0
        %1175 = vmatprep.subr.bf16.mxu0 0
        %1176 = vmatpush1.bf16.xpose.msra.mxu0 0
        %1177 = vmatprep.subr.bf16.mxu0 0
        %1178 = vmatpush1.bf16.xpose.msra.mxu0 0
        %1179 = vmatprep.subr.bf16.mxu0 0
        %1180 = vmatpush1.bf16.xpose.msra.mxu0 0
        %1181 = vmatprep.subr.bf16.mxu0 0
        %1182 = vmatpush1.bf16.xpose.msra.mxu0 0
        %1183 = vmatprep.subr.bf16.mxu0 0
        %1184 = vmatpush1.bf16.xpose.msra.mxu0 0
        %1185 = vmatprep.subr.bf16.mxu0 0
        %1186 = vmatpush1.bf16.xpose.msra.mxu0 0
        %1187 = vmatprep.mubr.bf16.mxu0 0
        %1188 = vmatmul.mubr.bf16.gmra.mrb[0].mxu0 %v1132
        %v1189 = vpop.f32.mrb[0].mxu0
        %v1190 = vadd.f32 0.0, %v1189
        %v1191 = vpop.f32.mrb[0].mxu0
        %v1192 = vpop.f32.mrb[0].mxu0
        %v1193 = vadd.f32 0.0, %v1192
        %v1194 = vpop.f32.mrb[0].mxu0
        %1195 = vmatprep.mubr.bf16.mxu0 0
        %1196 = vmatmul.mubr.bf16.gmra.mrb[0].mxu0 %v1135
        %v1197 = vpop.f32.mrb[0].mxu0
        %v1198 = vadd.f32 0.0, %v1197
        %v1199 = vpop.f32.mrb[0].mxu0
        %v1200 = vpop.f32.mrb[0].mxu0
        %v1201 = vadd.f32 0.0, %v1200
        %v1202 = vpop.f32.mrb[0].mxu0
        %1203 = vmatprep.mubr.bf16.mxu0 0
        %1204 = vmatmul.mubr.bf16.gmra.mrb[0].mxu0 %v1138
        %v1205 = vpop.f32.mrb[0].mxu0
        %v1206 = vadd.f32 0.0, %v1205
        %v1207 = vpop.f32.mrb[0].mxu0
        %v1208 = vpop.f32.mrb[0].mxu0
        %v1209 = vadd.f32 0.0, %v1208
        %v1210 = vpop.f32.mrb[0].mxu0
        %1211 = vmatprep.mubr.bf16.mxu0 0
        %1212 = vmatmul.mubr.bf16.gmra.mrb[0].mxu0 %v1141
        %v1213 = vpop.f32.mrb[0].mxu0
        %v1214 = vadd.f32 0.0, %v1213
        %v1215 = vpop.f32.mrb[0].mxu0
        %v1216 = vpop.f32.mrb[0].mxu0
        %v1217 = vadd.f32 0.0, %v1216
        %v1218 = vpop.f32.mrb[0].mxu0
        %1219 = vdwg.mxu0
        %vm1220 = vcmask 523264
        %v1221 = vsel %vm1220, %v1190, -inf
        %1222 = vmax.xlane.f32.xlu0 %v1221
        %v1223 = vpop.xlane.xlu0 %1222
        %v1224 = vsel %vm1220, %v1193, -inf
        %1225 = vmax.xlane.f32.xlu0 %v1224
        %v1226 = vpop.xlane.xlu0 %1225
        %v1227 = vsel %vm1220, %v1198, -inf
        %1228 = vmax.xlane.f32.xlu0 %v1227
        %v1229 = vpop.xlane.xlu0 %1228
        %v1230 = vsel %vm1220, %v1201, -inf
        %1231 = vmax.xlane.f32.xlu0 %v1230
        %v1232 = vpop.xlane.xlu0 %1231
        %v1233 = vsel %vm1220, %v1206, -inf
        %1234 = vmax.xlane.f32.xlu0 %v1233
        %v1235 = vpop.xlane.xlu0 %1234
        %v1236 = vsel %vm1220, %v1209, -inf
        %1237 = vmax.xlane.f32.xlu0 %v1236
        %v1238 = vpop.xlane.xlu0 %1237
        %v1239 = vsel %vm1220, %v1214, -inf
        %1240 = vmax.xlane.f32.xlu0 %v1239
        %v1241 = vpop.xlane.xlu0 %1240
        %v1242 = vsel %vm1220, %v1217, -inf
        %1243 = vmax.xlane.f32.xlu0 %v1242
        %v1244 = vpop.xlane.xlu0 %1243
        %v1245 = vsub.f32 %v1190, %v1223
        %v1246 = vsub.f32 %v1193, %v1226
        %v1247 = vsub.f32 %v1198, %v1229
        %v1248 = vsub.f32 %v1201, %v1232
        %v1249 = vsub.f32 %v1206, %v1235
        %v1250 = vsub.f32 %v1209, %v1238
        %v1251 = vsub.f32 %v1214, %v1241
        %v1252 = vsub.f32 %v1217, %v1244
        %v1253 = vmul.f32 %v1245, 1.442695
        %v1254 = vpow.pop %v1253
        %v1255 = vmul.f32 %v1246, 1.442695
        %v1256 = vpow.pop %v1255
        %v1257 = vmul.f32 %v1247, 1.442695
        %v1258 = vpow.pop %v1257
        %v1259 = vmul.f32 %v1248, 1.442695
        %v1260 = vpow.pop %v1259
        %v1261 = vmul.f32 %v1249, 1.442695
        %v1262 = vpow.pop %v1261
        %v1263 = vmul.f32 %v1250, 1.442695
        %v1264 = vpow.pop %v1263
        %v1265 = vmul.f32 %v1251, 1.442695
        %v1266 = vpow.pop %v1265
        %v1267 = vmul.f32 %v1252, 1.442695
        %v1268 = vpow.pop %v1267
        %v1269 = vsel %vm1220, %v1254, 0.0
        %1270 = vadd.xlane.f32.xlu0 %v1269
        %v1271 = vpop.xlane.xlu0 %1270
        %v1272 = vsel %vm1220, %v1256, 0.0
        %1273 = vadd.xlane.f32.xlu0 %v1272
        %v1274 = vpop.xlane.xlu0 %1273
        %v1275 = vsel %vm1220, %v1258, 0.0
        %1276 = vadd.xlane.f32.xlu0 %v1275
        %v1277 = vpop.xlane.xlu0 %1276
        %v1278 = vsel %vm1220, %v1260, 0.0
        %1279 = vadd.xlane.f32.xlu0 %v1278
        %v1280 = vpop.xlane.xlu0 %1279
        %v1281 = vsel %vm1220, %v1262, 0.0
        %1282 = vadd.xlane.f32.xlu0 %v1281
        %v1283 = vpop.xlane.xlu0 %1282
        %v1284 = vsel %vm1220, %v1264, 0.0
        %1285 = vadd.xlane.f32.xlu0 %v1284
        %v1286 = vpop.xlane.xlu0 %1285
        %v1287 = vsel %vm1220, %v1266, 0.0
        %1288 = vadd.xlane.f32.xlu0 %v1287
        %v1289 = vpop.xlane.xlu0 %1288
        %v1290 = vsel %vm1220, %v1268, 0.0
        %1291 = vadd.xlane.f32.xlu0 %v1290
        %v1292 = vpop.xlane.xlu0 %1291
        %v1293 = vrcp.pop %v1271
        %v1294 = vrcp.pop %v1274
        %v1295 = vrcp.pop %v1277
        %v1296 = vrcp.pop %v1280
        %v1297 = vrcp.pop %v1283
        %v1298 = vrcp.pop %v1286
        %v1299 = vrcp.pop %v1289
        %v1300 = vrcp.pop %v1292
        %v1301 = vpack.c.bf16 %v1256, %v1254
        %v1302 = vpack.c.bf16 %v1260, %v1258
        %v1303 = vpack.c.bf16 %v1264, %v1262
        %v1304 = vpack.c.bf16 %v1268, %v1266
        %v1306 = vsel %vm1220, %v1301, 0
        %v1309 = vsel %vm1220, %v1302, 0
        %v1312 = vsel %vm1220, %v1303, 0
        %v1315 = vsel %vm1220, %v1304, 0
        %1317 = vmatprep.subr.bf16.mxu0 0
        %1318 = vmatpush1.bf16.msra.mxu0 %v1127
        %1319 = vmatprep.subr.bf16.mxu0 0
        %1320 = vmatpush1.bf16.msra.mxu0 %v1128
        %1321 = vmatprep.subr.bf16.mxu0 0
        %1322 = vmatpush1.bf16.msra.mxu0 %v1129
        %1323 = vmatprep.subr.bf16.mxu0 0
        %1324 = vmatpush1.bf16.msra.mxu0 %v1130
        %1325 = vmatprep.subr.bf16.mxu0 0
        %1326 = vmatpush1.bf16.msra.mxu0 0
        %1327 = vmatprep.subr.bf16.mxu0 0
        %1328 = vmatpush1.bf16.msra.mxu0 0
        %1329 = vmatprep.subr.bf16.mxu0 0
        %1330 = vmatpush1.bf16.msra.mxu0 0
        %1331 = vmatprep.subr.bf16.mxu0 0
        %1332 = vmatpush1.bf16.msra.mxu0 0
        %1333 = vmatprep.subr.bf16.mxu0 0
        %1334 = vmatpush1.bf16.msra.mxu0 0
        %1335 = vmatprep.subr.bf16.mxu0 0
        %1336 = vmatpush1.bf16.msra.mxu0 0
        %1337 = vmatprep.subr.bf16.mxu0 0
        %1338 = vmatpush1.bf16.msra.mxu0 0
        %1339 = vmatprep.subr.bf16.mxu0 0
        %1340 = vmatpush1.bf16.msra.mxu0 0
        %1341 = vmatprep.subr.bf16.mxu0 0
        %1342 = vmatpush1.bf16.msra.mxu0 0
        %1343 = vmatprep.subr.bf16.mxu0 0
        %1344 = vmatpush1.bf16.msra.mxu0 0
        %1345 = vmatprep.subr.bf16.mxu0 0
        %1346 = vmatpush1.bf16.msra.mxu0 0
        %1347 = vmatprep.subr.bf16.mxu0 0
        %1348 = vmatpush1.bf16.msra.mxu0 0
        %1349 = vmatprep.mubr.bf16.mxu0 0
        %1350 = vmatmul.mubr.bf16.gmra.mrb[0].mxu0 %v1306
        %v1351 = vpop.f32.mrb[0].mxu0
        %v1352 = vadd.f32 0.0, %v1351
        %v1353 = vpop.f32.mrb[0].mxu0
        %v1354 = vpop.f32.mrb[0].mxu0
        %v1355 = vadd.f32 0.0, %v1354
        %v1356 = vpop.f32.mrb[0].mxu0
        %1357 = vmatprep.mubr.bf16.mxu0 0
        %1358 = vmatmul.mubr.bf16.gmra.mrb[0].mxu0 %v1309
        %v1359 = vpop.f32.mrb[0].mxu0
        %v1360 = vadd.f32 0.0, %v1359
        %v1361 = vpop.f32.mrb[0].mxu0
        %v1362 = vpop.f32.mrb[0].mxu0
        %v1363 = vadd.f32 0.0, %v1362
        %v1364 = vpop.f32.mrb[0].mxu0
        %1365 = vmatprep.mubr.bf16.mxu0 0
        %1366 = vmatmul.mubr.bf16.gmra.mrb[0].mxu0 %v1312
        %v1367 = vpop.f32.mrb[0].mxu0
        %v1368 = vadd.f32 0.0, %v1367
        %v1369 = vpop.f32.mrb[0].mxu0
        %v1370 = vpop.f32.mrb[0].mxu0
        %v1371 = vadd.f32 0.0, %v1370
        %v1372 = vpop.f32.mrb[0].mxu0
        %1373 = vmatprep.mubr.bf16.mxu0 0
        %1374 = vmatmul.mubr.bf16.gmra.mrb[0].mxu0 %v1315
        %v1375 = vpop.f32.mrb[0].mxu0
        %v1376 = vadd.f32 0.0, %v1375
        %v1377 = vpop.f32.mrb[0].mxu0
        %v1378 = vpop.f32.mrb[0].mxu0
        %v1379 = vadd.f32 0.0, %v1378
        %v1380 = vpop.f32.mrb[0].mxu0
        %1381 = vdwg.mxu0
        %v1382 = vmul.f32 %v1352, %v1293
        %v1383 = vmul.f32 %v1355, %v1294
        %v1384 = vmul.f32 %v1360, %v1295
        %v1385 = vmul.f32 %v1363, %v1296
        %v1386 = vmul.f32 %v1368, %v1297
        %v1387 = vmul.f32 %v1371, %v1298
        %v1388 = vmul.f32 %v1376, %v1299
        %v1389 = vmul.f32 %v1379, %v1300
        %1394 = vrot.lane.b32.xlu0 %v1119, 96
        %v1395 = vpop.permute.xlu0 %1394
        %1396 = vrot.lane.b32.xlu0 %v1120, 96
        %v1397 = vpop.permute.xlu0 %1396
        %1398 = vrot.lane.b32.xlu0 %v1121, 96
        %v1399 = vpop.permute.xlu0 %1398
        %1400 = vrot.lane.b32.xlu0 %v1122, 96
        %v1401 = vpop.permute.xlu0 %1400
        %1406 = vrot.lane.b32.xlu0 %v1123, 96
        %v1407 = vpop.permute.xlu0 %1406
        %1408 = vrot.lane.b32.xlu0 %v1124, 96
        %v1409 = vpop.permute.xlu0 %1408
        %1410 = vrot.lane.b32.xlu0 %v1125, 96
        %v1411 = vpop.permute.xlu0 %1410
        %1412 = vrot.lane.b32.xlu0 %v1126, 96
        %v1413 = vpop.permute.xlu0 %1412
        %v1415 = vsel %vm444, %v1395, 0
        %v1418 = vsel %vm444, %v1397, 0
        %v1421 = vsel %vm444, %v1399, 0
        %v1424 = vsel %vm444, %v1401, 0
        %v1427 = vsel %vm444, %v1407, 0
        %v1430 = vsel %vm444, %v1409, 0
        %v1433 = vsel %vm444, %v1411, 0
        %v1436 = vsel %vm444, %v1413, 0
        %1438 = vmatprep.subr.bf16.mxu0 0
        %1439 = vmatpush1.bf16.xpose.msra.mxu0 %v1427
        %1440 = vmatprep.subr.bf16.mxu0 0
        %1441 = vmatpush1.bf16.xpose.msra.mxu0 %v1430
        %1442 = vmatprep.subr.bf16.mxu0 0
        %1443 = vmatpush1.bf16.xpose.msra.mxu0 %v1433
        %1444 = vmatprep.subr.bf16.mxu0 0
        %1445 = vmatpush1.bf16.xpose.msra.mxu0 %v1436
        %1446 = vmatprep.subr.bf16.mxu0 0
        %1447 = vmatpush1.bf16.xpose.msra.mxu0 0
        %1448 = vmatprep.subr.bf16.mxu0 0
        %1449 = vmatpush1.bf16.xpose.msra.mxu0 0
        %1450 = vmatprep.subr.bf16.mxu0 0
        %1451 = vmatpush1.bf16.xpose.msra.mxu0 0
        %1452 = vmatprep.subr.bf16.mxu0 0
        %1453 = vmatpush1.bf16.xpose.msra.mxu0 0
        %1454 = vmatprep.subr.bf16.mxu0 0
        %1455 = vmatpush1.bf16.xpose.msra.mxu0 0
        %1456 = vmatprep.subr.bf16.mxu0 0
        %1457 = vmatpush1.bf16.xpose.msra.mxu0 0
        %1458 = vmatprep.subr.bf16.mxu0 0
        %1459 = vmatpush1.bf16.xpose.msra.mxu0 0
        %1460 = vmatprep.subr.bf16.mxu0 0
        %1461 = vmatpush1.bf16.xpose.msra.mxu0 0
        %1462 = vmatprep.subr.bf16.mxu0 0
        %1463 = vmatpush1.bf16.xpose.msra.mxu0 0
        %1464 = vmatprep.subr.bf16.mxu0 0
        %1465 = vmatpush1.bf16.xpose.msra.mxu0 0
        %1466 = vmatprep.subr.bf16.mxu0 0
        %1467 = vmatpush1.bf16.xpose.msra.mxu0 0
        %1468 = vmatprep.subr.bf16.mxu0 0
        %1469 = vmatpush1.bf16.xpose.msra.mxu0 0
        %1470 = vmatprep.mubr.bf16.mxu0 0
        %1471 = vmatmul.mubr.bf16.gmra.mrb[0].mxu0 %v1415
        %v1472 = vpop.f32.mrb[0].mxu0
        %v1473 = vadd.f32 0.0, %v1472
        %v1474 = vpop.f32.mrb[0].mxu0
        %v1475 = vpop.f32.mrb[0].mxu0
        %v1476 = vadd.f32 0.0, %v1475
        %v1477 = vpop.f32.mrb[0].mxu0
        %1478 = vmatprep.mubr.bf16.mxu0 0
        %1479 = vmatmul.mubr.bf16.gmra.mrb[0].mxu0 %v1418
        %v1480 = vpop.f32.mrb[0].mxu0
        %v1481 = vadd.f32 0.0, %v1480
        %v1482 = vpop.f32.mrb[0].mxu0
        %v1483 = vpop.f32.mrb[0].mxu0
        %v1484 = vadd.f32 0.0, %v1483
        %v1485 = vpop.f32.mrb[0].mxu0
        %1486 = vmatprep.mubr.bf16.mxu0 0
        %1487 = vmatmul.mubr.bf16.gmra.mrb[0].mxu0 %v1421
        %v1488 = vpop.f32.mrb[0].mxu0
        %v1489 = vadd.f32 0.0, %v1488
        %v1490 = vpop.f32.mrb[0].mxu0
        %v1491 = vpop.f32.mrb[0].mxu0
        %v1492 = vadd.f32 0.0, %v1491
        %v1493 = vpop.f32.mrb[0].mxu0
        %1494 = vmatprep.mubr.bf16.mxu0 0
        %1495 = vmatmul.mubr.bf16.gmra.mrb[0].mxu0 %v1424
        %v1496 = vpop.f32.mrb[0].mxu0
        %v1497 = vadd.f32 0.0, %v1496
        %v1498 = vpop.f32.mrb[0].mxu0
        %v1499 = vpop.f32.mrb[0].mxu0
        %v1500 = vadd.f32 0.0, %v1499
        %v1501 = vpop.f32.mrb[0].mxu0
        %1502 = vdwg.mxu0
        %v1503 = vsel %vm1220, %v1473, -inf
        %1504 = vmax.xlane.f32.xlu0 %v1503
        %v1505 = vpop.xlane.xlu0 %1504
        %v1506 = vsel %vm1220, %v1476, -inf
        %1507 = vmax.xlane.f32.xlu0 %v1506
        %v1508 = vpop.xlane.xlu0 %1507
        %v1509 = vsel %vm1220, %v1481, -inf
        %1510 = vmax.xlane.f32.xlu0 %v1509
        %v1511 = vpop.xlane.xlu0 %1510
        %v1512 = vsel %vm1220, %v1484, -inf
        %1513 = vmax.xlane.f32.xlu0 %v1512
        %v1514 = vpop.xlane.xlu0 %1513
        %v1515 = vsel %vm1220, %v1489, -inf
        %1516 = vmax.xlane.f32.xlu0 %v1515
        %v1517 = vpop.xlane.xlu0 %1516
        %v1518 = vsel %vm1220, %v1492, -inf
        %1519 = vmax.xlane.f32.xlu0 %v1518
        %v1520 = vpop.xlane.xlu0 %1519
        %v1521 = vsel %vm1220, %v1497, -inf
        %1522 = vmax.xlane.f32.xlu0 %v1521
        %v1523 = vpop.xlane.xlu0 %1522
        %v1524 = vsel %vm1220, %v1500, -inf
        %1525 = vmax.xlane.f32.xlu0 %v1524
        %v1526 = vpop.xlane.xlu0 %1525
        %v1527 = vsub.f32 %v1473, %v1505
        %v1528 = vsub.f32 %v1476, %v1508
        %v1529 = vsub.f32 %v1481, %v1511
        %v1530 = vsub.f32 %v1484, %v1514
        %v1531 = vsub.f32 %v1489, %v1517
        %v1532 = vsub.f32 %v1492, %v1520
        %v1533 = vsub.f32 %v1497, %v1523
        %v1534 = vsub.f32 %v1500, %v1526
        %v1535 = vmul.f32 %v1527, 1.442695
        %v1536 = vpow.pop %v1535
        %v1537 = vmul.f32 %v1528, 1.442695
        %v1538 = vpow.pop %v1537
        %v1539 = vmul.f32 %v1529, 1.442695
        %v1540 = vpow.pop %v1539
        %v1541 = vmul.f32 %v1530, 1.442695
        %v1542 = vpow.pop %v1541
        %v1543 = vmul.f32 %v1531, 1.442695
        %v1544 = vpow.pop %v1543
        %v1545 = vmul.f32 %v1532, 1.442695
        %v1546 = vpow.pop %v1545
        %v1547 = vmul.f32 %v1533, 1.442695
        %v1548 = vpow.pop %v1547
        %v1549 = vmul.f32 %v1534, 1.442695
        %v1550 = vpow.pop %v1549
        %v1551 = vsel %vm1220, %v1536, 0.0
        %1552 = vadd.xlane.f32.xlu0 %v1551
        %v1553 = vpop.xlane.xlu0 %1552
        %v1554 = vsel %vm1220, %v1538, 0.0
        %1555 = vadd.xlane.f32.xlu0 %v1554
        %v1556 = vpop.xlane.xlu0 %1555
        %v1557 = vsel %vm1220, %v1540, 0.0
        %1558 = vadd.xlane.f32.xlu0 %v1557
        %v1559 = vpop.xlane.xlu0 %1558
        %v1560 = vsel %vm1220, %v1542, 0.0
        %1561 = vadd.xlane.f32.xlu0 %v1560
        %v1562 = vpop.xlane.xlu0 %1561
        %v1563 = vsel %vm1220, %v1544, 0.0
        %1564 = vadd.xlane.f32.xlu0 %v1563
        %v1565 = vpop.xlane.xlu0 %1564
        %v1566 = vsel %vm1220, %v1546, 0.0
        %1567 = vadd.xlane.f32.xlu0 %v1566
        %v1568 = vpop.xlane.xlu0 %1567
        %v1569 = vsel %vm1220, %v1548, 0.0
        %1570 = vadd.xlane.f32.xlu0 %v1569
        %v1571 = vpop.xlane.xlu0 %1570
        %v1572 = vsel %vm1220, %v1550, 0.0
        %1573 = vadd.xlane.f32.xlu0 %v1572
        %v1574 = vpop.xlane.xlu0 %1573
        %v1575 = vrcp.pop %v1553
        %v1576 = vrcp.pop %v1556
        %v1577 = vrcp.pop %v1559
        %v1578 = vrcp.pop %v1562
        %v1579 = vrcp.pop %v1565
        %v1580 = vrcp.pop %v1568
        %v1581 = vrcp.pop %v1571
        %v1582 = vrcp.pop %v1574
        %v1583 = vpack.c.bf16 %v1538, %v1536
        %v1584 = vpack.c.bf16 %v1542, %v1540
        %v1585 = vpack.c.bf16 %v1546, %v1544
        %v1586 = vpack.c.bf16 %v1550, %v1548
        %1591 = vrot.lane.b32.xlu0 %v1127, 96
        %v1592 = vpop.permute.xlu0 %1591
        %1593 = vrot.lane.b32.xlu0 %v1128, 96
        %v1594 = vpop.permute.xlu0 %1593
        %1595 = vrot.lane.b32.xlu0 %v1129, 96
        %v1596 = vpop.permute.xlu0 %1595
        %1597 = vrot.lane.b32.xlu0 %v1130, 96
        %v1598 = vpop.permute.xlu0 %1597
        %v1604 = vsel %vm1220, %v1583, 0
        %v1607 = vsel %vm1220, %v1584, 0
        %v1610 = vsel %vm1220, %v1585, 0
        %v1613 = vsel %vm1220, %v1586, 0
        %1615 = vmatprep.subr.bf16.mxu0 0
        %1616 = vmatpush1.bf16.msra.mxu0 %v1592
        %1617 = vmatprep.subr.bf16.mxu0 0
        %1618 = vmatpush1.bf16.msra.mxu0 %v1594
        %1619 = vmatprep.subr.bf16.mxu0 0
        %1620 = vmatpush1.bf16.msra.mxu0 %v1596
        %1621 = vmatprep.subr.bf16.mxu0 0
        %1622 = vmatpush1.bf16.msra.mxu0 %v1598
        %1623 = vmatprep.subr.bf16.mxu0 0
        %1624 = vmatpush1.bf16.msra.mxu0 0
        %1625 = vmatprep.subr.bf16.mxu0 0
        %1626 = vmatpush1.bf16.msra.mxu0 0
        %1627 = vmatprep.subr.bf16.mxu0 0
        %1628 = vmatpush1.bf16.msra.mxu0 0
        %1629 = vmatprep.subr.bf16.mxu0 0
        %1630 = vmatpush1.bf16.msra.mxu0 0
        %1631 = vmatprep.subr.bf16.mxu0 0
        %1632 = vmatpush1.bf16.msra.mxu0 0
        %1633 = vmatprep.subr.bf16.mxu0 0
        %1634 = vmatpush1.bf16.msra.mxu0 0
        %1635 = vmatprep.subr.bf16.mxu0 0
        %1636 = vmatpush1.bf16.msra.mxu0 0
        %1637 = vmatprep.subr.bf16.mxu0 0
        %1638 = vmatpush1.bf16.msra.mxu0 0
        %1639 = vmatprep.subr.bf16.mxu0 0
        %1640 = vmatpush1.bf16.msra.mxu0 0
        %1641 = vmatprep.subr.bf16.mxu0 0
        %1642 = vmatpush1.bf16.msra.mxu0 0
        %1643 = vmatprep.subr.bf16.mxu0 0
        %1644 = vmatpush1.bf16.msra.mxu0 0
        %1645 = vmatprep.subr.bf16.mxu0 0
        %1646 = vmatpush1.bf16.msra.mxu0 0
        %1647 = vmatprep.mubr.bf16.mxu0 0
        %1648 = vmatmul.mubr.bf16.gmra.mrb[0].mxu0 %v1604
        %v1649 = vpop.f32.mrb[0].mxu0
        %v1650 = vadd.f32 0.0, %v1649
        %v1651 = vpop.f32.mrb[0].mxu0
        %v1652 = vpop.f32.mrb[0].mxu0
        %v1653 = vadd.f32 0.0, %v1652
        %v1654 = vpop.f32.mrb[0].mxu0
        %1655 = vmatprep.mubr.bf16.mxu0 0
        %1656 = vmatmul.mubr.bf16.gmra.mrb[0].mxu0 %v1607
        %v1657 = vpop.f32.mrb[0].mxu0
        %v1658 = vadd.f32 0.0, %v1657
        %v1659 = vpop.f32.mrb[0].mxu0
        %v1660 = vpop.f32.mrb[0].mxu0
        %v1661 = vadd.f32 0.0, %v1660
        %v1662 = vpop.f32.mrb[0].mxu0
        %1663 = vmatprep.mubr.bf16.mxu0 0
        %1664 = vmatmul.mubr.bf16.gmra.mrb[0].mxu0 %v1610
        %v1665 = vpop.f32.mrb[0].mxu0
        %v1666 = vadd.f32 0.0, %v1665
        %v1667 = vpop.f32.mrb[0].mxu0
        %v1668 = vpop.f32.mrb[0].mxu0
        %v1669 = vadd.f32 0.0, %v1668
        %v1670 = vpop.f32.mrb[0].mxu0
        %1671 = vmatprep.mubr.bf16.mxu0 0
        %1672 = vmatmul.mubr.bf16.gmra.mrb[0].mxu0 %v1613
        %v1673 = vpop.f32.mrb[0].mxu0
        %v1674 = vadd.f32 0.0, %v1673
        %v1675 = vpop.f32.mrb[0].mxu0
        %v1676 = vpop.f32.mrb[0].mxu0
        %v1677 = vadd.f32 0.0, %v1676
        %v1678 = vpop.f32.mrb[0].mxu0
        %1679 = vdwg.mxu0
        %v1680 = vmul.f32 %v1650, %v1575
        %v1681 = vmul.f32 %v1653, %v1576
        %v1682 = vmul.f32 %v1658, %v1577
        %v1683 = vmul.f32 %v1661, %v1578
        %v1684 = vmul.f32 %v1666, %v1579
        %v1685 = vmul.f32 %v1669, %v1580
        %v1686 = vmul.f32 %v1674, %v1581
        %v1687 = vmul.f32 %v1677, %v1582
        %1688 = vrot.lane.b32.xlu0 %v1119, 64
        %v1689 = vpop.permute.xlu0 %1688
        %1690 = vrot.lane.b32.xlu0 %v1120, 64
        %v1691 = vpop.permute.xlu0 %1690
        %1692 = vrot.lane.b32.xlu0 %v1121, 64
        %v1693 = vpop.permute.xlu0 %1692
        %1694 = vrot.lane.b32.xlu0 %v1122, 64
        %v1695 = vpop.permute.xlu0 %1694
        %1696 = vrot.lane.b32.xlu0 %v1123, 64
        %v1697 = vpop.permute.xlu0 %1696
        %1698 = vrot.lane.b32.xlu0 %v1124, 64
        %v1699 = vpop.permute.xlu0 %1698
        %1700 = vrot.lane.b32.xlu0 %v1125, 64
        %v1701 = vpop.permute.xlu0 %1700
        %1702 = vrot.lane.b32.xlu0 %v1126, 64
        %v1703 = vpop.permute.xlu0 %1702
        %v1705 = vsel %vm444, %v1689, 0
        %v1708 = vsel %vm444, %v1691, 0
        %v1711 = vsel %vm444, %v1693, 0
        %v1714 = vsel %vm444, %v1695, 0
        %v1717 = vsel %vm444, %v1697, 0
        %v1720 = vsel %vm444, %v1699, 0
        %v1723 = vsel %vm444, %v1701, 0
        %v1726 = vsel %vm444, %v1703, 0
        %1728 = vmatprep.subr.bf16.mxu0 0
        %1729 = vmatpush1.bf16.xpose.msra.mxu0 %v1717
        %1730 = vmatprep.subr.bf16.mxu0 0
        %1731 = vmatpush1.bf16.xpose.msra.mxu0 %v1720
        %1732 = vmatprep.subr.bf16.mxu0 0
        %1733 = vmatpush1.bf16.xpose.msra.mxu0 %v1723
        %1734 = vmatprep.subr.bf16.mxu0 0
        %1735 = vmatpush1.bf16.xpose.msra.mxu0 %v1726
        %1736 = vmatprep.subr.bf16.mxu0 0
        %1737 = vmatpush1.bf16.xpose.msra.mxu0 0
        %1738 = vmatprep.subr.bf16.mxu0 0
        %1739 = vmatpush1.bf16.xpose.msra.mxu0 0
        %1740 = vmatprep.subr.bf16.mxu0 0
        %1741 = vmatpush1.bf16.xpose.msra.mxu0 0
        %1742 = vmatprep.subr.bf16.mxu0 0
        %1743 = vmatpush1.bf16.xpose.msra.mxu0 0
        %1744 = vmatprep.subr.bf16.mxu0 0
        %1745 = vmatpush1.bf16.xpose.msra.mxu0 0
        %1746 = vmatprep.subr.bf16.mxu0 0
        %1747 = vmatpush1.bf16.xpose.msra.mxu0 0
        %1748 = vmatprep.subr.bf16.mxu0 0
        %1749 = vmatpush1.bf16.xpose.msra.mxu0 0
        %1750 = vmatprep.subr.bf16.mxu0 0
        %1751 = vmatpush1.bf16.xpose.msra.mxu0 0
        %1752 = vmatprep.subr.bf16.mxu0 0
        %1753 = vmatpush1.bf16.xpose.msra.mxu0 0
        %1754 = vmatprep.subr.bf16.mxu0 0
        %1755 = vmatpush1.bf16.xpose.msra.mxu0 0
        %1756 = vmatprep.subr.bf16.mxu0 0
        %1757 = vmatpush1.bf16.xpose.msra.mxu0 0
        %1758 = vmatprep.subr.bf16.mxu0 0
        %1759 = vmatpush1.bf16.xpose.msra.mxu0 0
        %1760 = vmatprep.mubr.bf16.mxu0 0
        %1761 = vmatmul.mubr.bf16.gmra.mrb[0].mxu0 %v1705
        %v1762 = vpop.f32.mrb[0].mxu0
        %v1763 = vadd.f32 0.0, %v1762
        %v1764 = vpop.f32.mrb[0].mxu0
        %v1765 = vpop.f32.mrb[0].mxu0
        %v1766 = vadd.f32 0.0, %v1765
        %v1767 = vpop.f32.mrb[0].mxu0
        %1768 = vmatprep.mubr.bf16.mxu0 0
        %1769 = vmatmul.mubr.bf16.gmra.mrb[0].mxu0 %v1708
        %v1770 = vpop.f32.mrb[0].mxu0
        %v1771 = vadd.f32 0.0, %v1770
        %v1772 = vpop.f32.mrb[0].mxu0
        %v1773 = vpop.f32.mrb[0].mxu0
        %v1774 = vadd.f32 0.0, %v1773
        %v1775 = vpop.f32.mrb[0].mxu0
        %1776 = vmatprep.mubr.bf16.mxu0 0
        %1777 = vmatmul.mubr.bf16.gmra.mrb[0].mxu0 %v1711
        %v1778 = vpop.f32.mrb[0].mxu0
        %v1779 = vadd.f32 0.0, %v1778
        %v1780 = vpop.f32.mrb[0].mxu0
        %v1781 = vpop.f32.mrb[0].mxu0
        %v1782 = vadd.f32 0.0, %v1781
        %v1783 = vpop.f32.mrb[0].mxu0
        %1784 = vmatprep.mubr.bf16.mxu0 0
        %1785 = vmatmul.mubr.bf16.gmra.mrb[0].mxu0 %v1714
        %v1786 = vpop.f32.mrb[0].mxu0
        %v1787 = vadd.f32 0.0, %v1786
        %v1788 = vpop.f32.mrb[0].mxu0
        %v1789 = vpop.f32.mrb[0].mxu0
        %v1790 = vadd.f32 0.0, %v1789
        %v1791 = vpop.f32.mrb[0].mxu0
        %1792 = vdwg.mxu0
        %v1793 = vsel %vm1220, %v1763, -inf
        %1794 = vmax.xlane.f32.xlu0 %v1793
        %v1795 = vpop.xlane.xlu0 %1794
        %v1796 = vsel %vm1220, %v1766, -inf
        %1797 = vmax.xlane.f32.xlu0 %v1796
        %v1798 = vpop.xlane.xlu0 %1797
        %v1799 = vsel %vm1220, %v1771, -inf
        %1800 = vmax.xlane.f32.xlu0 %v1799
        %v1801 = vpop.xlane.xlu0 %1800
        %v1802 = vsel %vm1220, %v1774, -inf
        %1803 = vmax.xlane.f32.xlu0 %v1802
        %v1804 = vpop.xlane.xlu0 %1803
        %v1805 = vsel %vm1220, %v1779, -inf
        %1806 = vmax.xlane.f32.xlu0 %v1805
        %v1807 = vpop.xlane.xlu0 %1806
        %v1808 = vsel %vm1220, %v1782, -inf
        %1809 = vmax.xlane.f32.xlu0 %v1808
        %v1810 = vpop.xlane.xlu0 %1809
        %v1811 = vsel %vm1220, %v1787, -inf
        %1812 = vmax.xlane.f32.xlu0 %v1811
        %v1813 = vpop.xlane.xlu0 %1812
        %v1814 = vsel %vm1220, %v1790, -inf
        %1815 = vmax.xlane.f32.xlu0 %v1814
        %v1816 = vpop.xlane.xlu0 %1815
        %v1817 = vsub.f32 %v1763, %v1795
        %v1818 = vsub.f32 %v1766, %v1798
        %v1819 = vsub.f32 %v1771, %v1801
        %v1820 = vsub.f32 %v1774, %v1804
        %v1821 = vsub.f32 %v1779, %v1807
        %v1822 = vsub.f32 %v1782, %v1810
        %v1823 = vsub.f32 %v1787, %v1813
        %v1824 = vsub.f32 %v1790, %v1816
        %v1825 = vmul.f32 %v1817, 1.442695
        %v1826 = vpow.pop %v1825
        %v1827 = vmul.f32 %v1818, 1.442695
        %v1828 = vpow.pop %v1827
        %v1829 = vmul.f32 %v1819, 1.442695
        %v1830 = vpow.pop %v1829
        %v1831 = vmul.f32 %v1820, 1.442695
        %v1832 = vpow.pop %v1831
        %v1833 = vmul.f32 %v1821, 1.442695
        %v1834 = vpow.pop %v1833
        %v1835 = vmul.f32 %v1822, 1.442695
        %v1836 = vpow.pop %v1835
        %v1837 = vmul.f32 %v1823, 1.442695
        %v1838 = vpow.pop %v1837
        %v1839 = vmul.f32 %v1824, 1.442695
        %v1840 = vpow.pop %v1839
        %v1841 = vsel %vm1220, %v1826, 0.0
        %1842 = vadd.xlane.f32.xlu0 %v1841
        %v1843 = vpop.xlane.xlu0 %1842
        %v1844 = vsel %vm1220, %v1828, 0.0
        %1845 = vadd.xlane.f32.xlu0 %v1844
        %v1846 = vpop.xlane.xlu0 %1845
        %v1847 = vsel %vm1220, %v1830, 0.0
        %1848 = vadd.xlane.f32.xlu0 %v1847
        %v1849 = vpop.xlane.xlu0 %1848
        %v1850 = vsel %vm1220, %v1832, 0.0
        %1851 = vadd.xlane.f32.xlu0 %v1850
        %v1852 = vpop.xlane.xlu0 %1851
        %v1853 = vsel %vm1220, %v1834, 0.0
        %1854 = vadd.xlane.f32.xlu0 %v1853
        %v1855 = vpop.xlane.xlu0 %1854
        %v1856 = vsel %vm1220, %v1836, 0.0
        %1857 = vadd.xlane.f32.xlu0 %v1856
        %v1858 = vpop.xlane.xlu0 %1857
        %v1859 = vsel %vm1220, %v1838, 0.0
        %1860 = vadd.xlane.f32.xlu0 %v1859
        %v1861 = vpop.xlane.xlu0 %1860
        %v1862 = vsel %vm1220, %v1840, 0.0
        %1863 = vadd.xlane.f32.xlu0 %v1862
        %v1864 = vpop.xlane.xlu0 %1863
        %v1865 = vrcp.pop %v1843
        %v1866 = vrcp.pop %v1846
        %v1867 = vrcp.pop %v1849
        %v1868 = vrcp.pop %v1852
        %v1869 = vrcp.pop %v1855
        %v1870 = vrcp.pop %v1858
        %v1871 = vrcp.pop %v1861
        %v1872 = vrcp.pop %v1864
        %v1873 = vpack.c.bf16 %v1828, %v1826
        %v1874 = vpack.c.bf16 %v1832, %v1830
        %v1875 = vpack.c.bf16 %v1836, %v1834
        %v1876 = vpack.c.bf16 %v1840, %v1838
        %1877 = vrot.lane.b32.xlu0 %v1127, 64
        %v1878 = vpop.permute.xlu0 %1877
        %1879 = vrot.lane.b32.xlu0 %v1128, 64
        %v1880 = vpop.permute.xlu0 %1879
        %1881 = vrot.lane.b32.xlu0 %v1129, 64
        %v1882 = vpop.permute.xlu0 %1881
        %1883 = vrot.lane.b32.xlu0 %v1130, 64
        %v1884 = vpop.permute.xlu0 %1883
        %v1890 = vsel %vm1220, %v1873, 0
        %v1893 = vsel %vm1220, %v1874, 0
        %v1896 = vsel %vm1220, %v1875, 0
        %v1899 = vsel %vm1220, %v1876, 0
        %1901 = vmatprep.subr.bf16.mxu0 0
        %1902 = vmatpush1.bf16.msra.mxu0 %v1878
        %1903 = vmatprep.subr.bf16.mxu0 0
        %1904 = vmatpush1.bf16.msra.mxu0 %v1880
        %1905 = vmatprep.subr.bf16.mxu0 0
        %1906 = vmatpush1.bf16.msra.mxu0 %v1882
        %1907 = vmatprep.subr.bf16.mxu0 0
        %1908 = vmatpush1.bf16.msra.mxu0 %v1884
        %1909 = vmatprep.subr.bf16.mxu0 0
        %1910 = vmatpush1.bf16.msra.mxu0 0
        %1911 = vmatprep.subr.bf16.mxu0 0
        %1912 = vmatpush1.bf16.msra.mxu0 0
        %1913 = vmatprep.subr.bf16.mxu0 0
        %1914 = vmatpush1.bf16.msra.mxu0 0
        %1915 = vmatprep.subr.bf16.mxu0 0
        %1916 = vmatpush1.bf16.msra.mxu0 0
        %1917 = vmatprep.subr.bf16.mxu0 0
        %1918 = vmatpush1.bf16.msra.mxu0 0
        %1919 = vmatprep.subr.bf16.mxu0 0
        %1920 = vmatpush1.bf16.msra.mxu0 0
        %1921 = vmatprep.subr.bf16.mxu0 0
        %1922 = vmatpush1.bf16.msra.mxu0 0
        %1923 = vmatprep.subr.bf16.mxu0 0
        %1924 = vmatpush1.bf16.msra.mxu0 0
        %1925 = vmatprep.subr.bf16.mxu0 0
        %1926 = vmatpush1.bf16.msra.mxu0 0
        %1927 = vmatprep.subr.bf16.mxu0 0
        %1928 = vmatpush1.bf16.msra.mxu0 0
        %1929 = vmatprep.subr.bf16.mxu0 0
        %1930 = vmatpush1.bf16.msra.mxu0 0
        %1931 = vmatprep.subr.bf16.mxu0 0
        %1932 = vmatpush1.bf16.msra.mxu0 0
        %1933 = vmatprep.mubr.bf16.mxu0 0
        %1934 = vmatmul.mubr.bf16.gmra.mrb[0].mxu0 %v1890
        %v1935 = vpop.f32.mrb[0].mxu0
        %v1936 = vadd.f32 0.0, %v1935
        %v1937 = vpop.f32.mrb[0].mxu0
        %v1938 = vpop.f32.mrb[0].mxu0
        %v1939 = vadd.f32 0.0, %v1938
        %v1940 = vpop.f32.mrb[0].mxu0
        %1941 = vmatprep.mubr.bf16.mxu0 0
        %1942 = vmatmul.mubr.bf16.gmra.mrb[0].mxu0 %v1893
        %v1943 = vpop.f32.mrb[0].mxu0
        %v1944 = vadd.f32 0.0, %v1943
        %v1945 = vpop.f32.mrb[0].mxu0
        %v1946 = vpop.f32.mrb[0].mxu0
        %v1947 = vadd.f32 0.0, %v1946
        %v1948 = vpop.f32.mrb[0].mxu0
        %1949 = vmatprep.mubr.bf16.mxu0 0
        %1950 = vmatmul.mubr.bf16.gmra.mrb[0].mxu0 %v1896
        %v1951 = vpop.f32.mrb[0].mxu0
        %v1952 = vadd.f32 0.0, %v1951
        %v1953 = vpop.f32.mrb[0].mxu0
        %v1954 = vpop.f32.mrb[0].mxu0
        %v1955 = vadd.f32 0.0, %v1954
        %v1956 = vpop.f32.mrb[0].mxu0
        %1957 = vmatprep.mubr.bf16.mxu0 0
        %1958 = vmatmul.mubr.bf16.gmra.mrb[0].mxu0 %v1899
        %v1959 = vpop.f32.mrb[0].mxu0
        %v1960 = vadd.f32 0.0, %v1959
        %v1961 = vpop.f32.mrb[0].mxu0
        %v1962 = vpop.f32.mrb[0].mxu0
        %v1963 = vadd.f32 0.0, %v1962
        %v1964 = vpop.f32.mrb[0].mxu0
        %1965 = vdwg.mxu0
        %v1966 = vmul.f32 %v1936, %v1865
        %v1967 = vmul.f32 %v1939, %v1866
        %v1968 = vmul.f32 %v1944, %v1867
        %v1969 = vmul.f32 %v1947, %v1868
        %v1970 = vmul.f32 %v1952, %v1869
        %v1971 = vmul.f32 %v1955, %v1870
        %v1972 = vmul.f32 %v1960, %v1871
        %v1973 = vmul.f32 %v1963, %v1872
        %1974 = vrot.lane.b32.xlu0 %v1119, 32
        %v1975 = vpop.permute.xlu0 %1974
        %1976 = vrot.lane.b32.xlu0 %v1120, 32
        %v1977 = vpop.permute.xlu0 %1976
        %1978 = vrot.lane.b32.xlu0 %v1121, 32
        %v1979 = vpop.permute.xlu0 %1978
        %1980 = vrot.lane.b32.xlu0 %v1122, 32
        %v1981 = vpop.permute.xlu0 %1980
        %1982 = vrot.lane.b32.xlu0 %v1123, 32
        %v1983 = vpop.permute.xlu0 %1982
        %1984 = vrot.lane.b32.xlu0 %v1124, 32
        %v1985 = vpop.permute.xlu0 %1984
        %1986 = vrot.lane.b32.xlu0 %v1125, 32
        %v1987 = vpop.permute.xlu0 %1986
        %1988 = vrot.lane.b32.xlu0 %v1126, 32
        %v1989 = vpop.permute.xlu0 %1988
        %v1991 = vsel %vm444, %v1975, 0
        %v1994 = vsel %vm444, %v1977, 0
        %v1997 = vsel %vm444, %v1979, 0
        %v2000 = vsel %vm444, %v1981, 0
        %v2003 = vsel %vm444, %v1983, 0
        %v2006 = vsel %vm444, %v1985, 0
        %v2009 = vsel %vm444, %v1987, 0
        %v2012 = vsel %vm444, %v1989, 0
        %2014 = vmatprep.subr.bf16.mxu0 0
        %2015 = vmatpush1.bf16.xpose.msra.mxu0 %v2003
        %2016 = vmatprep.subr.bf16.mxu0 0
        %2017 = vmatpush1.bf16.xpose.msra.mxu0 %v2006
        %2018 = vmatprep.subr.bf16.mxu0 0
        %2019 = vmatpush1.bf16.xpose.msra.mxu0 %v2009
        %2020 = vmatprep.subr.bf16.mxu0 0
        %2021 = vmatpush1.bf16.xpose.msra.mxu0 %v2012
        %2022 = vmatprep.subr.bf16.mxu0 0
        %2023 = vmatpush1.bf16.xpose.msra.mxu0 0
        %2024 = vmatprep.subr.bf16.mxu0 0
        %2025 = vmatpush1.bf16.xpose.msra.mxu0 0
        %2026 = vmatprep.subr.bf16.mxu0 0
        %2027 = vmatpush1.bf16.xpose.msra.mxu0 0
        %2028 = vmatprep.subr.bf16.mxu0 0
        %2029 = vmatpush1.bf16.xpose.msra.mxu0 0
        %2030 = vmatprep.subr.bf16.mxu0 0
        %2031 = vmatpush1.bf16.xpose.msra.mxu0 0
        %2032 = vmatprep.subr.bf16.mxu0 0
        %2033 = vmatpush1.bf16.xpose.msra.mxu0 0
        %2034 = vmatprep.subr.bf16.mxu0 0
        %2035 = vmatpush1.bf16.xpose.msra.mxu0 0
        %2036 = vmatprep.subr.bf16.mxu0 0
        %2037 = vmatpush1.bf16.xpose.msra.mxu0 0
        %2038 = vmatprep.subr.bf16.mxu0 0
        %2039 = vmatpush1.bf16.xpose.msra.mxu0 0
        %2040 = vmatprep.subr.bf16.mxu0 0
        %2041 = vmatpush1.bf16.xpose.msra.mxu0 0
        %2042 = vmatprep.subr.bf16.mxu0 0
        %2043 = vmatpush1.bf16.xpose.msra.mxu0 0
        %2044 = vmatprep.subr.bf16.mxu0 0
        %2045 = vmatpush1.bf16.xpose.msra.mxu0 0
        %2046 = vmatprep.mubr.bf16.mxu0 0
        %2047 = vmatmul.mubr.bf16.gmra.mrb[0].mxu0 %v1991
        %v2048 = vpop.f32.mrb[0].mxu0
        %v2049 = vadd.f32 0.0, %v2048
        %v2050 = vpop.f32.mrb[0].mxu0
        %v2051 = vpop.f32.mrb[0].mxu0
        %v2052 = vadd.f32 0.0, %v2051
        %v2053 = vpop.f32.mrb[0].mxu0
        %2054 = vmatprep.mubr.bf16.mxu0 0
        %2055 = vmatmul.mubr.bf16.gmra.mrb[0].mxu0 %v1994
        %v2056 = vpop.f32.mrb[0].mxu0
        %v2057 = vadd.f32 0.0, %v2056
        %v2058 = vpop.f32.mrb[0].mxu0
        %v2059 = vpop.f32.mrb[0].mxu0
        %v2060 = vadd.f32 0.0, %v2059
        %v2061 = vpop.f32.mrb[0].mxu0
        %2062 = vmatprep.mubr.bf16.mxu0 0
        %2063 = vmatmul.mubr.bf16.gmra.mrb[0].mxu0 %v1997
        %v2064 = vpop.f32.mrb[0].mxu0
        %v2065 = vadd.f32 0.0, %v2064
        %v2066 = vpop.f32.mrb[0].mxu0
        %v2067 = vpop.f32.mrb[0].mxu0
        %v2068 = vadd.f32 0.0, %v2067
        %v2069 = vpop.f32.mrb[0].mxu0
        %2070 = vmatprep.mubr.bf16.mxu0 0
        %2071 = vmatmul.mubr.bf16.gmra.mrb[0].mxu0 %v2000
        %v2072 = vpop.f32.mrb[0].mxu0
        %v2073 = vadd.f32 0.0, %v2072
        %v2074 = vpop.f32.mrb[0].mxu0
        %v2075 = vpop.f32.mrb[0].mxu0
        %v2076 = vadd.f32 0.0, %v2075
        %v2077 = vpop.f32.mrb[0].mxu0
        %2078 = vdwg.mxu0
        %v2079 = vsel %vm1220, %v2049, -inf
        %2080 = vmax.xlane.f32.xlu0 %v2079
        %v2081 = vpop.xlane.xlu0 %2080
        %v2082 = vsel %vm1220, %v2052, -inf
        %2083 = vmax.xlane.f32.xlu0 %v2082
        %v2084 = vpop.xlane.xlu0 %2083
        %v2085 = vsel %vm1220, %v2057, -inf
        %2086 = vmax.xlane.f32.xlu0 %v2085
        %v2087 = vpop.xlane.xlu0 %2086
        %v2088 = vsel %vm1220, %v2060, -inf
        %2089 = vmax.xlane.f32.xlu0 %v2088
        %v2090 = vpop.xlane.xlu0 %2089
        %v2091 = vsel %vm1220, %v2065, -inf
        %2092 = vmax.xlane.f32.xlu0 %v2091
        %v2093 = vpop.xlane.xlu0 %2092
        %v2094 = vsel %vm1220, %v2068, -inf
        %2095 = vmax.xlane.f32.xlu0 %v2094
        %v2096 = vpop.xlane.xlu0 %2095
        %v2097 = vsel %vm1220, %v2073, -inf
        %2098 = vmax.xlane.f32.xlu0 %v2097
        %v2099 = vpop.xlane.xlu0 %2098
        %v2100 = vsel %vm1220, %v2076, -inf
        %2101 = vmax.xlane.f32.xlu0 %v2100
        %v2102 = vpop.xlane.xlu0 %2101
        %v2103 = vsub.f32 %v2049, %v2081
        %v2104 = vsub.f32 %v2052, %v2084
        %v2105 = vsub.f32 %v2057, %v2087
        %v2106 = vsub.f32 %v2060, %v2090
        %v2107 = vsub.f32 %v2065, %v2093
        %v2108 = vsub.f32 %v2068, %v2096
        %v2109 = vsub.f32 %v2073, %v2099
        %v2110 = vsub.f32 %v2076, %v2102
        %v2111 = vmul.f32 %v2103, 1.442695
        %v2112 = vpow.pop %v2111
        %v2113 = vmul.f32 %v2104, 1.442695
        %v2114 = vpow.pop %v2113
        %v2115 = vmul.f32 %v2105, 1.442695
        %v2116 = vpow.pop %v2115
        %v2117 = vmul.f32 %v2106, 1.442695
        %v2118 = vpow.pop %v2117
        %v2119 = vmul.f32 %v2107, 1.442695
        %v2120 = vpow.pop %v2119
        %v2121 = vmul.f32 %v2108, 1.442695
        %v2122 = vpow.pop %v2121
        %v2123 = vmul.f32 %v2109, 1.442695
        %v2124 = vpow.pop %v2123
        %v2125 = vmul.f32 %v2110, 1.442695
        %v2126 = vpow.pop %v2125
        %v2127 = vsel %vm1220, %v2112, 0.0
        %2128 = vadd.xlane.f32.xlu0 %v2127
        %v2129 = vpop.xlane.xlu0 %2128
        %v2130 = vsel %vm1220, %v2114, 0.0
        %2131 = vadd.xlane.f32.xlu0 %v2130
        %v2132 = vpop.xlane.xlu0 %2131
        %v2133 = vsel %vm1220, %v2116, 0.0
        %2134 = vadd.xlane.f32.xlu0 %v2133
        %v2135 = vpop.xlane.xlu0 %2134
        %v2136 = vsel %vm1220, %v2118, 0.0
        %2137 = vadd.xlane.f32.xlu0 %v2136
        %v2138 = vpop.xlane.xlu0 %2137
        %v2139 = vsel %vm1220, %v2120, 0.0
        %2140 = vadd.xlane.f32.xlu0 %v2139
        %v2141 = vpop.xlane.xlu0 %2140
        %v2142 = vsel %vm1220, %v2122, 0.0
        %2143 = vadd.xlane.f32.xlu0 %v2142
        %v2144 = vpop.xlane.xlu0 %2143
        %v2145 = vsel %vm1220, %v2124, 0.0
        %2146 = vadd.xlane.f32.xlu0 %v2145
        %v2147 = vpop.xlane.xlu0 %2146
        %v2148 = vsel %vm1220, %v2126, 0.0
        %2149 = vadd.xlane.f32.xlu0 %v2148
        %v2150 = vpop.xlane.xlu0 %2149
        %v2151 = vrcp.pop %v2129
        %v2152 = vrcp.pop %v2132
        %v2153 = vrcp.pop %v2135
        %v2154 = vrcp.pop %v2138
        %v2155 = vrcp.pop %v2141
        %v2156 = vrcp.pop %v2144
        %v2157 = vrcp.pop %v2147
        %v2158 = vrcp.pop %v2150
        %v2159 = vpack.c.bf16 %v2114, %v2112
        %v2160 = vpack.c.bf16 %v2118, %v2116
        %v2161 = vpack.c.bf16 %v2122, %v2120
        %v2162 = vpack.c.bf16 %v2126, %v2124
        %2163 = vrot.lane.b32.xlu0 %v1127, 32
        %v2164 = vpop.permute.xlu0 %2163
        %2165 = vrot.lane.b32.xlu0 %v1128, 32
        %v2166 = vpop.permute.xlu0 %2165
        %2167 = vrot.lane.b32.xlu0 %v1129, 32
        %v2168 = vpop.permute.xlu0 %2167
        %2169 = vrot.lane.b32.xlu0 %v1130, 32
        %v2170 = vpop.permute.xlu0 %2169
        %v2176 = vsel %vm1220, %v2159, 0
        %v2179 = vsel %vm1220, %v2160, 0
        %v2182 = vsel %vm1220, %v2161, 0
        %v2185 = vsel %vm1220, %v2162, 0
        %2187 = vmatprep.subr.bf16.mxu0 0
        %2188 = vmatpush1.bf16.msra.mxu0 %v2164
        %2189 = vmatprep.subr.bf16.mxu0 0
        %2190 = vmatpush1.bf16.msra.mxu0 %v2166
        %2191 = vmatprep.subr.bf16.mxu0 0
        %2192 = vmatpush1.bf16.msra.mxu0 %v2168
        %2193 = vmatprep.subr.bf16.mxu0 0
        %2194 = vmatpush1.bf16.msra.mxu0 %v2170
        %2195 = vmatprep.subr.bf16.mxu0 0
        %2196 = vmatpush1.bf16.msra.mxu0 0
        %2197 = vmatprep.subr.bf16.mxu0 0
        %2198 = vmatpush1.bf16.msra.mxu0 0
        %2199 = vmatprep.subr.bf16.mxu0 0
        %2200 = vmatpush1.bf16.msra.mxu0 0
        %2201 = vmatprep.subr.bf16.mxu0 0
        %2202 = vmatpush1.bf16.msra.mxu0 0
        %2203 = vmatprep.subr.bf16.mxu0 0
        %2204 = vmatpush1.bf16.msra.mxu0 0
        %2205 = vmatprep.subr.bf16.mxu0 0
        %2206 = vmatpush1.bf16.msra.mxu0 0
        %2207 = vmatprep.subr.bf16.mxu0 0
        %2208 = vmatpush1.bf16.msra.mxu0 0
        %2209 = vmatprep.subr.bf16.mxu0 0
        %2210 = vmatpush1.bf16.msra.mxu0 0
        %2211 = vmatprep.subr.bf16.mxu0 0
        %2212 = vmatpush1.bf16.msra.mxu0 0
        %2213 = vmatprep.subr.bf16.mxu0 0
        %2214 = vmatpush1.bf16.msra.mxu0 0
        %2215 = vmatprep.subr.bf16.mxu0 0
        %2216 = vmatpush1.bf16.msra.mxu0 0
        %2217 = vmatprep.subr.bf16.mxu0 0
        %2218 = vmatpush1.bf16.msra.mxu0 0
        %2219 = vmatprep.mubr.bf16.mxu0 0
        %2220 = vmatmul.mubr.bf16.gmra.mrb[0].mxu0 %v2176
        %v2221 = vpop.f32.mrb[0].mxu0
        %v2222 = vadd.f32 0.0, %v2221
        %v2223 = vpop.f32.mrb[0].mxu0
        %v2224 = vpop.f32.mrb[0].mxu0
        %v2225 = vadd.f32 0.0, %v2224
        %v2226 = vpop.f32.mrb[0].mxu0
        %2227 = vmatprep.mubr.bf16.mxu0 0
        %2228 = vmatmul.mubr.bf16.gmra.mrb[0].mxu0 %v2179
        %v2229 = vpop.f32.mrb[0].mxu0
        %v2230 = vadd.f32 0.0, %v2229
        %v2231 = vpop.f32.mrb[0].mxu0
        %v2232 = vpop.f32.mrb[0].mxu0
        %v2233 = vadd.f32 0.0, %v2232
        %v2234 = vpop.f32.mrb[0].mxu0
        %2235 = vmatprep.mubr.bf16.mxu0 0
        %2236 = vmatmul.mubr.bf16.gmra.mrb[0].mxu0 %v2182
        %v2237 = vpop.f32.mrb[0].mxu0
        %v2238 = vadd.f32 0.0, %v2237
        %v2239 = vpop.f32.mrb[0].mxu0
        %v2240 = vpop.f32.mrb[0].mxu0
        %v2241 = vadd.f32 0.0, %v2240
        %v2242 = vpop.f32.mrb[0].mxu0
        %2243 = vmatprep.mubr.bf16.mxu0 0
        %2244 = vmatmul.mubr.bf16.gmra.mrb[0].mxu0 %v2185
        %v2245 = vpop.f32.mrb[0].mxu0
        %v2246 = vadd.f32 0.0, %v2245
        %v2247 = vpop.f32.mrb[0].mxu0
        %v2248 = vpop.f32.mrb[0].mxu0
        %v2249 = vadd.f32 0.0, %v2248
        %v2250 = vpop.f32.mrb[0].mxu0
        %2251 = vdwg.mxu0
        %v2252 = vmul.f32 %v2222, %v2151
        %v2253 = vmul.f32 %v2225, %v2152
        %v2254 = vmul.f32 %v2230, %v2153
        %v2255 = vmul.f32 %v2233, %v2154
        %v2256 = vmul.f32 %v2238, %v2155
        %v2257 = vmul.f32 %v2241, %v2156
        %v2258 = vmul.f32 %v2246, %v2157
        %v2259 = vmul.f32 %v2249, %v2158
        %2268 = vrot.lane.b32.xlu0 %v1680, 32
        %v2269 = vpop.permute.xlu0 %2268
        %2270 = vrot.lane.b32.xlu0 %v1681, 32
        %v2271 = vpop.permute.xlu0 %2270
        %2272 = vrot.lane.b32.xlu0 %v1682, 32
        %v2273 = vpop.permute.xlu0 %2272
        %2274 = vrot.lane.b32.xlu0 %v1683, 32
        %v2275 = vpop.permute.xlu0 %2274
        %2276 = vrot.lane.b32.xlu0 %v1684, 32
        %v2277 = vpop.permute.xlu0 %2276
        %2278 = vrot.lane.b32.xlu0 %v1685, 32
        %v2279 = vpop.permute.xlu0 %2278
        %2280 = vrot.lane.b32.xlu0 %v1686, 32
        %v2281 = vpop.permute.xlu0 %2280
        %2282 = vrot.lane.b32.xlu0 %v1687, 32
        %v2283 = vpop.permute.xlu0 %2282
        %2300 = vrot.lane.b32.xlu0 %v1966, 64
        %v2301 = vpop.permute.xlu0 %2300
        %2302 = vrot.lane.b32.xlu0 %v1967, 64
        %v2303 = vpop.permute.xlu0 %2302
        %2304 = vrot.lane.b32.xlu0 %v1968, 64
        %v2305 = vpop.permute.xlu0 %2304
        %2306 = vrot.lane.b32.xlu0 %v1969, 64
        %v2307 = vpop.permute.xlu0 %2306
        %2308 = vrot.lane.b32.xlu0 %v1970, 64
        %v2309 = vpop.permute.xlu0 %2308
        %2310 = vrot.lane.b32.xlu0 %v1971, 64
        %v2311 = vpop.permute.xlu0 %2310
        %2312 = vrot.lane.b32.xlu0 %v1972, 64
        %v2313 = vpop.permute.xlu0 %2312
        %2314 = vrot.lane.b32.xlu0 %v1973, 64
        %v2315 = vpop.permute.xlu0 %2314
        %2332 = vrot.lane.b32.xlu0 %v2252, 96
        %v2333 = vpop.permute.xlu0 %2332
        %2334 = vrot.lane.b32.xlu0 %v2253, 96
        %v2335 = vpop.permute.xlu0 %2334
        %2336 = vrot.lane.b32.xlu0 %v2254, 96
        %v2337 = vpop.permute.xlu0 %2336
        %2338 = vrot.lane.b32.xlu0 %v2255, 96
        %v2339 = vpop.permute.xlu0 %2338
        %2340 = vrot.lane.b32.xlu0 %v2256, 96
        %v2341 = vpop.permute.xlu0 %2340
        %2342 = vrot.lane.b32.xlu0 %v2257, 96
        %v2343 = vpop.permute.xlu0 %2342
        %2344 = vrot.lane.b32.xlu0 %v2258, 96
        %v2345 = vpop.permute.xlu0 %2344
        %2346 = vrot.lane.b32.xlu0 %v2259, 96
        %v2347 = vpop.permute.xlu0 %2346
        %v2356 = vsel %vm444, %v1382, %v2269
        %v2357 = vsel %vm444, %v1383, %v2271
        %v2358 = vsel %vm444, %v1384, %v2273
        %v2359 = vsel %vm444, %v1385, %v2275
        %v2360 = vsel %vm444, %v1386, %v2277
        %v2361 = vsel %vm444, %v1387, %v2279
        %v2362 = vsel %vm444, %v1388, %v2281
        %v2363 = vsel %vm444, %v1389, %v2283
        %v2364 = vsel %vm1220, %v2356, %v2301
        %v2365 = vsel %vm1220, %v2357, %v2303
        %v2366 = vsel %vm1220, %v2358, %v2305
        %v2367 = vsel %vm1220, %v2359, %v2307
        %v2368 = vsel %vm1220, %v2360, %v2309
        %v2369 = vsel %vm1220, %v2361, %v2311
        %v2370 = vsel %vm1220, %v2362, %v2313
        %v2371 = vsel %vm1220, %v2363, %v2315
        %vm2372 = vcmask 785408
        %v2373 = vsel %vm2372, %v2364, %v2333
        %v2374 = vsel %vm2372, %v2365, %v2335
        %v2375 = vsel %vm2372, %v2366, %v2337
        %v2376 = vsel %vm2372, %v2367, %v2339
        %v2377 = vsel %vm2372, %v2368, %v2341
        %v2378 = vsel %vm2372, %v2369, %v2343
        %v2379 = vsel %vm2372, %v2370, %v2345
        %v2380 = vsel %vm2372, %v2371, %v2347
        %v2381 = vpack.c.bf16 %v2374, %v2373
        %v2382 = vpack.c.bf16 %v2376, %v2375
        %v2383 = vpack.c.bf16 %v2378, %v2377
        %v2384 = vpack.c.bf16 %v2380, %v2379
        %v2385 = vld [vmem:[#allocation8] sm:$0xf]
        %v2386 = vld [vmem:[#allocation8 + $0x4] sm:$0xf]
        %v2387 = vld [vmem:[#allocation8 + $0x8] sm:$0xf]
        %v2388 = vld [vmem:[#allocation8 + $0xc] sm:$0xf]
        %v2389 = vld [vmem:[#allocation8 + $0x10] sm:$0xf]
        %v2390 = vld [vmem:[#allocation8 + $0x14] sm:$0xf]
        %v2391 = vld [vmem:[#allocation8 + $0x18] sm:$0xf]
        %v2392 = vld [vmem:[#allocation8 + $0x1c] sm:$0xf]
        %v2393 = vld [vmem:[#allocation8 + $0x20] sm:$0xf]
        %v2394 = vld [vmem:[#allocation8 + $0x24] sm:$0xf]
        %v2395 = vld [vmem:[#allocation8 + $0x28] sm:$0xf]
        %v2396 = vld [vmem:[#allocation8 + $0x2c] sm:$0xf]
        %v2397 = vld [vmem:[#allocation8 + $0x30] sm:$0xf]
        %v2398 = vld [vmem:[#allocation8 + $0x34] sm:$0xf]
        %v2399 = vld [vmem:[#allocation8 + $0x38] sm:$0xf]
        %v2400 = vld [vmem:[#allocation8 + $0x3c] sm:$0xf]
        %v2401 = vld [vmem:[%s7] sm:$0x1]
        %v2403 = vlaneseq
        %v2404 = vshrl.u32 %v2403, 7
        %v2405 = vsub.s32 0, %v2404
        %v2406 = vrot.slane %v2401, %v2405
        %v2424 = vunpack.c.l.b16 %v2385
        %v2425 = vunpack.c.l.b16 %v2386
        %v2426 = vunpack.c.l.b16 %v2387
        %v2427 = vunpack.c.l.b16 %v2388
        %v2428 = vunpack.c.l.b16 %v2389
        %v2429 = vunpack.c.l.b16 %v2390
        %v2430 = vunpack.c.l.b16 %v2391
        %v2431 = vunpack.c.l.b16 %v2392
        %v2432 = vunpack.c.l.b16 %v2393
        %v2433 = vunpack.c.l.b16 %v2394
        %v2434 = vunpack.c.l.b16 %v2395
        %v2435 = vunpack.c.l.b16 %v2396
        %v2436 = vunpack.c.l.b16 %v2397
        %v2437 = vunpack.c.l.b16 %v2398
        %v2438 = vunpack.c.l.b16 %v2399
        %v2439 = vunpack.c.l.b16 %v2400
        %v2440 = vpack.c.b16 %v2425, %v2424
        %v2441 = vpack.c.b16 %v2427, %v2426
        %v2442 = vpack.c.b16 %v2429, %v2428
        %v2443 = vpack.c.b16 %v2431, %v2430
        %v2444 = vpack.c.b16 %v2433, %v2432
        %v2445 = vpack.c.b16 %v2435, %v2434
        %v2446 = vpack.c.b16 %v2437, %v2436
        %v2447 = vpack.c.b16 %v2439, %v2438
        %2456 = vmatprep.subr.bf16.mxu0 0
        %2457 = vmatpush1.bf16.msra.mxu0 %v2440
        %2458 = vmatprep.subr.bf16.mxu0 0
        %2459 = vmatpush1.bf16.msra.mxu0 %v2441
        %2460 = vmatprep.subr.bf16.mxu0 0
        %2461 = vmatpush1.bf16.msra.mxu0 %v2442
        %2462 = vmatprep.subr.bf16.mxu0 0
        %2463 = vmatpush1.bf16.msra.mxu0 %v2443
        %2464 = vmatprep.subr.bf16.mxu0 0
        %2465 = vmatpush1.bf16.msra.mxu0 %v2444
        %2466 = vmatprep.subr.bf16.mxu0 0
        %2467 = vmatpush1.bf16.msra.mxu0 %v2445
        %2468 = vmatprep.subr.bf16.mxu0 0
        %2469 = vmatpush1.bf16.msra.mxu0 %v2446
        %2470 = vmatprep.subr.bf16.mxu0 0
        %2471 = vmatpush1.bf16.msra.mxu0 %v2447
        %2472 = vmatprep.subr.bf16.mxu0 0
        %2473 = vmatpush1.bf16.msra.mxu0 0
        %2474 = vmatprep.subr.bf16.mxu0 0
        %2475 = vmatpush1.bf16.msra.mxu0 0
        %2476 = vmatprep.subr.bf16.mxu0 0
        %2477 = vmatpush1.bf16.msra.mxu0 0
        %2478 = vmatprep.subr.bf16.mxu0 0
        %2479 = vmatpush1.bf16.msra.mxu0 0
        %2480 = vmatprep.subr.bf16.mxu0 0
        %2481 = vmatpush1.bf16.msra.mxu0 0
        %2482 = vmatprep.subr.bf16.mxu0 0
        %2483 = vmatpush1.bf16.msra.mxu0 0
        %2484 = vmatprep.subr.bf16.mxu0 0
        %2485 = vmatpush1.bf16.msra.mxu0 0
        %2486 = vmatprep.subr.bf16.mxu0 0
        %2487 = vmatpush1.bf16.msra.mxu0 0
        %2488 = vmatprep.mubr.bf16.mxu0 0
        %2489 = vmatmul.mubr.bf16.gmra.mrb[0].mxu0 %v2381
        %v2490 = vpop.f32.mrb[0].mxu0
        %v2491 = vadd.f32 %v2406, %v2490
        %v2492 = vpop.f32.mrb[0].mxu0
        %v2493 = vpop.f32.mrb[0].mxu0
        %v2494 = vadd.f32 %v2406, %v2493
        %v2495 = vpop.f32.mrb[0].mxu0
        %2496 = vmatprep.mubr.bf16.mxu0 0
        %2497 = vmatmul.mubr.bf16.gmra.mrb[0].mxu0 %v2382
        %v2498 = vpop.f32.mrb[0].mxu0
        %v2499 = vadd.f32 %v2406, %v2498
        %v2500 = vpop.f32.mrb[0].mxu0
        %v2501 = vpop.f32.mrb[0].mxu0
        %v2502 = vadd.f32 %v2406, %v2501
        %v2503 = vpop.f32.mrb[0].mxu0
        %2504 = vmatprep.mubr.bf16.mxu0 0
        %2505 = vmatmul.mubr.bf16.gmra.mrb[0].mxu0 %v2383
        %v2506 = vpop.f32.mrb[0].mxu0
        %v2507 = vadd.f32 %v2406, %v2506
        %v2508 = vpop.f32.mrb[0].mxu0
        %v2509 = vpop.f32.mrb[0].mxu0
        %v2510 = vadd.f32 %v2406, %v2509
        %v2511 = vpop.f32.mrb[0].mxu0
        %2512 = vmatprep.mubr.bf16.mxu0 0
        %2513 = vmatmul.mubr.bf16.gmra.mrb[0].mxu0 %v2384
        %v2514 = vpop.f32.mrb[0].mxu0
        %v2515 = vadd.f32 %v2406, %v2514
        %v2516 = vpop.f32.mrb[0].mxu0
        %v2517 = vpop.f32.mrb[0].mxu0
        %v2518 = vadd.f32 %v2406, %v2517
        %v2519 = vpop.f32.mrb[0].mxu0
        %2520 = vdwg.mxu0
        %v2521 = vld [vmem:[%s333] sm:$0xff]
        %v2522 = vld [vmem:[%s333 + $0x8] sm:$0xff]
        %v2523 = vld [vmem:[%s333 + $0x10] sm:$0xff]
        %v2524 = vld [vmem:[%s333 + $0x18] sm:$0xff]
        %v2525 = vld [vmem:[%s333 + $0x20] sm:$0xff]
        %v2526 = vld [vmem:[%s333 + $0x28] sm:$0xff]
        %v2527 = vld [vmem:[%s333 + $0x30] sm:$0xff]
        %v2528 = vld [vmem:[%s333 + $0x38] sm:$0xff]
        %v2529 = vadd.f32 %v2491, %v2521
        %v2530 = vadd.f32 %v2494, %v2522
        %v2531 = vadd.f32 %v2499, %v2523
        %v2532 = vadd.f32 %v2502, %v2524
        %v2533 = vadd.f32 %v2507, %v2525
        %v2534 = vadd.f32 %v2510, %v2526
        %v2535 = vadd.f32 %v2515, %v2527
        %v2536 = vadd.f32 %v2518, %v2528
        %2537 = vst [vmem:[%s328] sm:$0xff] %v2529
        %2538 = vst [vmem:[%s328 + $0x8] sm:$0xff] %v2530
        %2539 = vst [vmem:[%s328 + $0x10] sm:$0xff] %v2531
        %2540 = vst [vmem:[%s328 + $0x18] sm:$0xff] %v2532
        %2541 = vst [vmem:[%s328 + $0x20] sm:$0xff] %v2533
        %2542 = vst [vmem:[%s328 + $0x28] sm:$0xff] %v2534
        %2543 = vst [vmem:[%s328 + $0x30] sm:$0xff] %v2535
        %2544 = vst [vmem:[%s328 + $0x38] sm:$0xff] %v2536
        %s2545 = sand.u32 %s205, 1
        %s2546 = scalar_lea.sflag [#allocation7], %s2545
        %s2547 = sand.u32 %s205, 1
        %s2548 = smul.addr %s2547, 64
        %s2549 = scalar_lea.vmem [#allocation10], %s2548
        // Predicated region
        $region61: #{tpu_custom_call.1} parent=51 // pred_check
          %p2550 = pneg %p215
        $region62: #{tpu_custom_call.1} parent=51 // pred_check_branch
          %2552 = sbr.rel (%p2550) target = $region64
        $region63: #{tpu_custom_call.1} parent=51 // pred_region
          %s2554 = ssub.s32 1024, 1024
          %2555 = vsyncadd %s2546, %s2554
          %s2556 = smul.addr %s24, 8
          %s2557 = smul.addr %s2556, 128
          %s2558 = scalar_lea.hbm %s8, %s2557
          %s2559 = sshll.u32 %s2549, 4
          %s2560 = int_to_ptr.vmem [resolvable:$true] %s2559
          %2565 = dma.vmem_to_hbm [thread:$0]  %s2560, 1024, %s2558, %s2546, 128, 128, 8
        $region64: #{tpu_custom_call.1} parent=51 // pred_fallthru
          _
      $region52: #{tpu_custom_call.1} parent=5 // pred_fallthru
        _
      %p2566 = scmp.le.s32.totalorder 2, %s19
      // Predicated region
      $region65: #{tpu_custom_call.1} parent=5 // pred_check
        %p2567 = pneg %p2566
      $region66: #{tpu_custom_call.1} parent=5 // pred_check_branch
        %2569 = sbr.rel (%p2567) target = $region68
      $region67: #{tpu_custom_call.1} parent=5 // pred_region
        %s2570 = ssub.s32 %s19, 2
        // Predicated region
        $region69: #{tpu_custom_call.1} parent=67 // pred_check
          %p2571 = pneg %p221
        $region70: #{tpu_custom_call.1} parent=67 // pred_check_branch
          %2573 = sbr.rel (%p2571) target = $region72
        $region71: #{tpu_custom_call.1} parent=67 // pred_region
          %s2574 = sand.u32 %s206, 1
          %s2575 = scalar_lea.sflag [#allocation7], %s2574
          %s2576 = sand.u32 %s206, 1
          %s2577 = smul.addr %s2576, 64
          %s2578 = scalar_lea.vmem [#allocation10], %s2577
          %2579 = dma.done %s2575, 1024
        $region72: #{tpu_custom_call.1} parent=67 // pred_fallthru
          _
      $region68: #{tpu_custom_call.1} parent=5 // pred_fallthru
        _
    $region6: #{tpu_custom_call.1} parent=1 // loop_footer
      %s23 = sadd.s32 1, %s19
    $region7: #{tpu_custom_call.1} parent=1 // loop_footer_branch
      %18 = sbr.rel target = $region3
    $region8: #{tpu_custom_call.1} parent=1 // loop_exit
      _
    %2580 = vsyncpa [#allocation6], 1
    %s2581 = scalar_lea.sflag [#allocation6], 1
    %2582 = vsyncpa %s2581, 1
    %2583 = vsyncpa [#allocation9], 1
    %2584 = vsyncpa [#allocation7], 1
    %s2585 = scalar_lea.sflag [#allocation7], 1
    %2586 = vsyncpa %s2585, 1

</llo_original>
